<compile_context>
chip_gen: v5e
topology: v5e:2x2
jax: 0.10.0
libtpu: 0.0.40
codegen_flags: <defaults>
</compile_context>

<pallas_src>
import jax
import jax.numpy as jnp
from jax import lax
from jax.experimental import pallas as pl
from jax.experimental.pallas import tpu as pltpu

GATE = 128  # lanes per gate block (= vreg lane width)


def gru_fc_kernel(ids_ref, table_ref, whh_ref, misc_ref, out_ref, xpre_ref):
    """Embedding gather + GRU recurrence + final Linear, fully in-kernel.

    ids_ref  : (S*Bp, 1) int32   token ids, time-major then (padded) batch.
    table_ref: (V, 3*GATE) f32   fused table: emb @ W_ih^T + b_ih + [b_hr|b_hz|0],
                                 each gate zero-padded to its own 128-lane block.
    whh_ref  : (GATE, 3*GATE) f32 gate-blocked hidden weights (rows H..GATE zero).
    misc_ref : (3, GATE) f32     row0 = b_hn, row1 = fc_w, row2[0] = fc_b.
    out_ref  : (Bp, 1) f32       logits for the padded batch.
    xpre_ref : (S*Bp, 3*GATE) f32 VMEM scratch for fused input preactivations.
    """
    SB = ids_ref.shape[0]
    V = table_ref.shape[0]
    G = table_ref.shape[1] // 3          # == GATE
    Bp = out_ref.shape[0]
    S = SB // Bp

    # --- In-kernel embedding gather: one-hot @ fused table on the idle MXU ---
    onehot = (ids_ref[...] ==
              lax.broadcasted_iota(jnp.int32, (SB, V), 1)).astype(jnp.float32)
    xpre_ref[...] = jnp.dot(onehot, table_ref[...],
                            preferred_element_type=jnp.float32)      # (S*Bp, 3G)

    whh = whh_ref[...]                                               # (G, 3G)
    # Hoist the (1,G)->(Bp,G) broadcast out of the recurrence (no CSE in JAX).
    bhn = jnp.broadcast_to(misc_ref[0:1, :], (Bp, G))

    def sigmoid(x):  # single EUP tanh push; avoids exp + exact divide
        return 0.5 * jnp.tanh(0.5 * x) + 0.5

    h = jnp.zeros((Bp, G), jnp.float32)  # pad lanes H..G stay exactly 0
    for t in range(S):                   # S static -> full unroll, static slices
        xp = xpre_ref[t * Bp:(t + 1) * Bp, :]                        # tile-aligned slice
        hp = jnp.dot(h, whh, preferred_element_type=jnp.float32)     # 1 MXU issue / step
        rz = sigmoid(xp[:, :2 * G] + hp[:, :2 * G])                  # fused r|z gates
        r = rz[:, :G]
        z = rz[:, G:]
        n = jnp.tanh(xp[:, 2 * G:] + r * (hp[:, 2 * G:] + bhn))
        h = (1.0 - z) * n + z * h

    # Final Linear as VPU multiply + XLU lane reduction (pad lanes are zero).
    out_ref[...] = (jnp.sum(h * misc_ref[1:2, :], axis=-1, keepdims=True)
                    + misc_ref[2:3, 0:1])


def prepare_params(params):
    """One-time parameter fusion / gate-block padding (all slicing lives here)."""
    H = params["w_hh"].shape[1]
    assert H <= GATE, "hidden_size must fit in one 128-lane gate block"

    emb = params["embedding"].astype(jnp.float32)     # (V, E)
    w_ih = params["w_ih"].astype(jnp.float32)         # (3H, E), rows r|z|n (PyTorch order)
    w_hh = params["w_hh"].astype(jnp.float32)         # (3H, H)
    b_ih = params["b_ih"].astype(jnp.float32)         # (3H,)
    b_hh = params["b_hh"].astype(jnp.float32)         # (3H,)

    def pad_gate_blocks(x):  # (..., 3H) -> (..., 3*GATE), each gate 0-padded to 128 lanes
        lead = x.shape[:-1]
        x = x.reshape(lead + (3, H))
        x = jnp.pad(x, [(0, 0)] * len(lead) + [(0, 0), (0, GATE - H)])
        return x.reshape(lead + (3 * GATE,))

    # Fold input projection + b_ih + (b_hr, b_hz) into the embedding table:
    #   table[v] = emb[v] @ W_ih^T + b_ih + [b_hr | b_hz | 0]
    # (b_hn must stay inside r*(...) in the kernel -> kept in misc row 0.)
    bias_row = b_ih + jnp.concatenate(
        [b_hh[:H], b_hh[H:2 * H], jnp.zeros((H,), jnp.float32)])
    fused_table = pad_gate_blocks(emb @ w_ih.T + bias_row[None, :])       # (V, 3*GATE)

    w_hh_blk = jnp.pad(pad_gate_blocks(w_hh.T), ((0, GATE - H), (0, 0)))  # (GATE, 3*GATE)

    misc = jnp.zeros((3, GATE), jnp.float32)
    misc = misc.at[0, :H].set(b_hh[2 * H:])                                   # b_hn
    misc = misc.at[1, :H].set(params["fc_w"].astype(jnp.float32).reshape(H))  # fc_w
    misc = misc.at[2, 0].set(params["fc_b"].astype(jnp.float32)[0])           # fc_b

    return {"fused_table": fused_table, "w_hh_blk": w_hh_blk, "misc": misc}


@jax.jit
def text_classifier_forward(ids, prepped):
    """ids: (B, S) int32 token ids (B = 10 to match y_out.view(10)).
    Returns (B,) float32 logits."""
    B, S = ids.shape
    Bp = ((B + 7) // 8) * 8                              # pad batch to full sublane groups
    ids_p = jnp.pad(ids.astype(jnp.int32), ((0, Bp - B), (0, 0)))
    ids_tm = ids_p.T.reshape(S * Bp, 1)                  # time-major; 512 B, negligible

    tbl = prepped["fused_table"]
    vmem = pl.BlockSpec(memory_space=pltpu.MemorySpace.VMEM)
    out = pl.pallas_call(
        gru_fc_kernel,
        out_shape=jax.ShapeDtypeStruct((Bp, 1), jnp.float32),
        in_specs=[vmem, vmem, vmem, vmem],
        out_specs=vmem,
        scratch_shapes=[pltpu.VMEM((S * Bp, tbl.shape[1]), jnp.float32)],
    )(ids_tm, tbl, prepped["w_hh_blk"], prepped["misc"])

    # torch.squeeze(y_out, dim=0) drops the num_layers=1 axis; .view(10) -> (B,)
    return out[:B, 0]


def _reference_forward(ids, params):
    """Pure-JAX reference of the original PyTorch forward (unfused params)."""
    H = params["w_hh"].shape[1]
    x = params["embedding"].astype(jnp.float32)[ids]     # (B, S, E)
    B, S, _ = x.shape
    w_ih, w_hh = params["w_ih"], params["w_hh"]
    b_ih, b_hh = params["b_ih"], params["b_hh"]
    h = jnp.zeros((B, H), jnp.float32)
    for t in range(S):
        gi = x[:, t, :] @ w_ih.T + b_ih
        gh = h @ w_hh.T + b_hh
        r = jax.nn.sigmoid(gi[:, :H] + gh[:, :H])
        z = jax.nn.sigmoid(gi[:, H:2 * H] + gh[:, H:2 * H])
        n = jnp.tanh(gi[:, 2 * H:] + r * gh[:, 2 * H:])
        h = (1.0 - z) * n + z * h
    y = h @ params["fc_w"].T + params["fc_b"]             # (B, 1)
    return y.reshape(B)


if __name__ == "__main__":
    # Small deterministic config consistent with the forward pass:
    # batch must be 10 (y_out.view(10)); num_layers = 1; batch_first = True.
    V, E, H, B, S = 64, 32, 32, 10, 8

    key = jax.random.PRNGKey(0)
    ks = jax.random.split(key, 8)
    params = {
        "embedding": 0.1 * jax.random.normal(ks[0], (V, E), jnp.float32),  # Word2Vec stand-in
        "w_ih":      0.1 * jax.random.normal(ks[1], (3 * H, E), jnp.float32),
        "w_hh":      0.1 * jax.random.normal(ks[2], (3 * H, H), jnp.float32),
        "b_ih":      0.1 * jax.random.normal(ks[3], (3 * H,), jnp.float32),
        "b_hh":      0.1 * jax.random.normal(ks[4], (3 * H,), jnp.float32),
        "fc_w":      0.1 * jax.random.normal(ks[5], (1, H), jnp.float32),
        "fc_b":      0.1 * jax.random.normal(ks[6], (1,), jnp.float32),
    }
    ids = jax.random.randint(ks[7], (B, S), 0, V, dtype=jnp.int32)

    prepped = prepare_params(params)
    y = jax.block_until_ready(text_classifier_forward(ids, prepped))
    assert y.shape == (B,) and y.dtype == jnp.float32

    y_ref = jax.block_until_ready(_reference_forward(ids, params))
    assert jnp.allclose(y, y_ref, atol=5e-3, rtol=5e-3)
    print("KERNEL_OK")
</pallas_src>

<mosaic_0001>
module attributes {stable_mosaic.version = 11 : i64} {
  func.func @gru_fc_kernel(%arg0: memref<128x1xi32, #tpu.memory_space<vmem>>, %arg1: memref<64x384xf32, #tpu.memory_space<vmem>>, %arg2: memref<128x384xf32, #tpu.memory_space<vmem>>, %arg3: memref<3x128xf32, #tpu.memory_space<vmem>>, %arg4: memref<16x1xf32, #tpu.memory_space<vmem>>, %arg5: memref<128x384xf32, #tpu.memory_space<vmem>>) attributes {dimension_semantics = [], scalar_prefetch = 0 : i64, scratch_operands = 1 : i64, tpu.core_type = #tpu.core_type<tc>} {
    %c0 = arith.constant 0 : index
    %c0_0 = arith.constant 0 : index
    %0 = vector.load %arg0[%c0, %c0_0] : memref<128x1xi32, #tpu.memory_space<vmem>>, vector<128x1xi32>
    %1 = tpu.iota {dimensions = array<i32: 1>} : vector<128x64xi32>
    %2 = vector.broadcast %0 : vector<128x1xi32> to vector<128x64xi32>
    %3 = arith.cmpi eq, %2, %1 : vector<128x64xi32>
    %4 = arith.extui %3 : vector<128x64xi1> to vector<128x64xi32>
    %5 = arith.sitofp %4 : vector<128x64xi32> to vector<128x64xf32>
    %c0_1 = arith.constant 0 : index
    %c0_2 = arith.constant 0 : index
    %6 = vector.load %arg1[%c0_1, %c0_2] : memref<64x384xf32, #tpu.memory_space<vmem>>, vector<64x384xf32>
    %cst = arith.constant dense<0.000000e+00> : vector<128x384xf32>
    %7 = tpu.matmul %5, %6, %cst {dimension_numbers = #tpu.dot_dimension_numbers<[1], [0], [0], [1], [0, 0, 1, 1], [], []>} : vector<128x64xf32>, vector<64x384xf32>, vector<128x384xf32> -> vector<128x384xf32>
    %c0_3 = arith.constant 0 : index
    %c0_4 = arith.constant 0 : index
    %8 = vector.load %arg5[%c0_3, %c0_4] : memref<128x384xf32, #tpu.memory_space<vmem>>, vector<128x384xf32>
    tpu.vector_store %arg5[%c0_3, %c0_4], %7 {strides = array<i32>} : memref<128x384xf32, #tpu.memory_space<vmem>>, vector<128x384xf32>,
    %c0_5 = arith.constant 0 : index
    %c0_6 = arith.constant 0 : index
    %9 = vector.load %arg2[%c0_5, %c0_6] : memref<128x384xf32, #tpu.memory_space<vmem>>, vector<128x384xf32>
    %c0_7 = arith.constant 0 : index
    %c0_8 = arith.constant 0 : index
    %10 = vector.load %arg3[%c0_7, %c0_8] : memref<3x128xf32, #tpu.memory_space<vmem>>, vector<1x128xf32>
    %11 = vector.shape_cast %10 : vector<1x128xf32> to vector<1x128xf32>
    %12 = vector.broadcast %11 : vector<1x128xf32> to vector<16x128xf32>
    %cst_9 = arith.constant 0.000000e+00 : f32
    %13 = vector.broadcast %cst_9 : f32 to vector<16x128xf32>
    %c0_10 = arith.constant 0 : index
    %c0_11 = arith.constant 0 : index
    %14 = vector.load %arg5[%c0_10, %c0_11] : memref<128x384xf32, #tpu.memory_space<vmem>>, vector<16x384xf32>
    %cst_12 = arith.constant dense<0.000000e+00> : vector<16x384xf32>
    %15 = tpu.matmul %13, %9, %cst_12 {dimension_numbers = #tpu.dot_dimension_numbers<[1], [0], [0], [1], [0, 0, 1, 1], [], []>} : vector<16x128xf32>, vector<128x384xf32>, vector<16x384xf32> -> vector<16x384xf32>
    %16 = vector.extract_strided_slice %14 {offsets = [0, 0], sizes = [16, 256], strides = [1, 1]} : vector<16x384xf32> to vector<16x256xf32>
    %17 = vector.extract_strided_slice %15 {offsets = [0, 0], sizes = [16, 256], strides = [1, 1]} : vector<16x384xf32> to vector<16x256xf32>
    %18 = arith.addf %16, %17 : vector<16x256xf32>
    %cst_13 = arith.constant 5.000000e-01 : f32
    %19 = vector.broadcast %cst_13 : f32 to vector<16x256xf32>
    %20 = arith.mulf %19, %18 : vector<16x256xf32>
    %21 = math.tanh %20 : vector<16x256xf32>
    %cst_14 = arith.constant 5.000000e-01 : f32
    %22 = vector.broadcast %cst_14 : f32 to vector<16x256xf32>
    %23 = arith.mulf %22, %21 : vector<16x256xf32>
    %cst_15 = arith.constant 5.000000e-01 : f32
    %24 = vector.broadcast %cst_15 : f32 to vector<16x256xf32>
    %25 = arith.addf %23, %24 : vector<16x256xf32>
    %26 = vector.extract_strided_slice %25 {offsets = [0, 0], sizes = [16, 128], strides = [1, 1]} : vector<16x256xf32> to vector<16x128xf32>
    %27 = vector.extract_strided_slice %25 {offsets = [0, 128], sizes = [16, 128], strides = [1, 1]} : vector<16x256xf32> to vector<16x128xf32>
    %28 = vector.extract_strided_slice %14 {offsets = [0, 256], sizes = [16, 128], strides = [1, 1]} : vector<16x384xf32> to vector<16x128xf32>
    %29 = vector.extract_strided_slice %15 {offsets = [0, 256], sizes = [16, 128], strides = [1, 1]} : vector<16x384xf32> to vector<16x128xf32>
    %30 = arith.addf %29, %12 : vector<16x128xf32>
    %31 = arith.mulf %26, %30 : vector<16x128xf32>
    %32 = arith.addf %28, %31 : vector<16x128xf32>
    %33 = math.tanh %32 : vector<16x128xf32>
    %cst_16 = arith.constant 1.000000e+00 : f32
    %34 = vector.broadcast %cst_16 : f32 to vector<16x128xf32>
    %35 = arith.subf %34, %27 : vector<16x128xf32>
    %36 = arith.mulf %35, %33 : vector<16x128xf32>
    %37 = arith.mulf %27, %13 : vector<16x128xf32>
    %38 = arith.addf %36, %37 : vector<16x128xf32>
    %c16 = arith.constant 16 : index
    %c0_17 = arith.constant 0 : index
    %39 = vector.load %arg5[%c16, %c0_17] : memref<128x384xf32, #tpu.memory_space<vmem>>, vector<16x384xf32>
    %cst_18 = arith.constant dense<0.000000e+00> : vector<16x384xf32>
    %40 = tpu.matmul %38, %9, %cst_18 {dimension_numbers = #tpu.dot_dimension_numbers<[1], [0], [0], [1], [0, 0, 1, 1], [], []>} : vector<16x128xf32>, vector<128x384xf32>, vector<16x384xf32> -> vector<16x384xf32>
    %41 = vector.extract_strided_slice %39 {offsets = [0, 0], sizes = [16, 256], strides = [1, 1]} : vector<16x384xf32> to vector<16x256xf32>
    %42 = vector.extract_strided_slice %40 {offsets = [0, 0], sizes = [16, 256], strides = [1, 1]} : vector<16x384xf32> to vector<16x256xf32>
    %43 = arith.addf %41, %42 : vector<16x256xf32>
    %cst_19 = arith.constant 5.000000e-01 : f32
    %44 = vector.broadcast %cst_19 : f32 to vector<16x256xf32>
    %45 = arith.mulf %44, %43 : vector<16x256xf32>
    %46 = math.tanh %45 : vector<16x256xf32>
    %cst_20 = arith.constant 5.000000e-01 : f32
    %47 = vector.broadcast %cst_20 : f32 to vector<16x256xf32>
    %48 = arith.mulf %47, %46 : vector<16x256xf32>
    %cst_21 = arith.constant 5.000000e-01 : f32
    %49 = vector.broadcast %cst_21 : f32 to vector<16x256xf32>
    %50 = arith.addf %48, %49 : vector<16x256xf32>
    %51 = vector.extract_strided_slice %50 {offsets = [0, 0], sizes = [16, 128], strides = [1, 1]} : vector<16x256xf32> to vector<16x128xf32>
    %52 = vector.extract_strided_slice %50 {offsets = [0, 128], sizes = [16, 128], strides = [1, 1]} : vector<16x256xf32> to vector<16x128xf32>
    %53 = vector.extract_strided_slice %39 {offsets = [0, 256], sizes = [16, 128], strides = [1, 1]} : vector<16x384xf32> to vector<16x128xf32>
    %54 = vector.extract_strided_slice %40 {offsets = [0, 256], sizes = [16, 128], strides = [1, 1]} : vector<16x384xf32> to vector<16x128xf32>
    %55 = arith.addf %54, %12 : vector<16x128xf32>
    %56 = arith.mulf %51, %55 : vector<16x128xf32>
    %57 = arith.addf %53, %56 : vector<16x128xf32>
    %58 = math.tanh %57 : vector<16x128xf32>
    %cst_22 = arith.constant 1.000000e+00 : f32
    %59 = vector.broadcast %cst_22 : f32 to vector<16x128xf32>
    %60 = arith.subf %59, %52 : vector<16x128xf32>
    %61 = arith.mulf %60, %58 : vector<16x128xf32>
    %62 = arith.mulf %52, %38 : vector<16x128xf32>
    %63 = arith.addf %61, %62 : vector<16x128xf32>
    %c32 = arith.constant 32 : index
    %c0_23 = arith.constant 0 : index
    %64 = vector.load %arg5[%c32, %c0_23] : memref<128x384xf32, #tpu.memory_space<vmem>>, vector<16x384xf32>
    %cst_24 = arith.constant dense<0.000000e+00> : vector<16x384xf32>
    %65 = tpu.matmul %63, %9, %cst_24 {dimension_numbers = #tpu.dot_dimension_numbers<[1], [0], [0], [1], [0, 0, 1, 1], [], []>} : vector<16x128xf32>, vector<128x384xf32>, vector<16x384xf32> -> vector<16x384xf32>
    %66 = vector.extract_strided_slice %64 {offsets = [0, 0], sizes = [16, 256], strides = [1, 1]} : vector<16x384xf32> to vector<16x256xf32>
    %67 = vector.extract_strided_slice %65 {offsets = [0, 0], sizes = [16, 256], strides = [1, 1]} : vector<16x384xf32> to vector<16x256xf32>
    %68 = arith.addf %66, %67 : vector<16x256xf32>
    %cst_25 = arith.constant 5.000000e-01 : f32
    %69 = vector.broadcast %cst_25 : f32 to vector<16x256xf32>
    %70 = arith.mulf %69, %68 : vector<16x256xf32>
    %71 = math.tanh %70 : vector<16x256xf32>
    %cst_26 = arith.constant 5.000000e-01 : f32
    %72 = vector.broadcast %cst_26 : f32 to vector<16x256xf32>
    %73 = arith.mulf %72, %71 : vector<16x256xf32>
    %cst_27 = arith.constant 5.000000e-01 : f32
    %74 = vector.broadcast %cst_27 : f32 to vector<16x256xf32>
    %75 = arith.addf %73, %74 : vector<16x256xf32>
    %76 = vector.extract_strided_slice %75 {offsets = [0, 0], sizes = [16, 128], strides = [1, 1]} : vector<16x256xf32> to vector<16x128xf32>
    %77 = vector.extract_strided_slice %75 {offsets = [0, 128], sizes = [16, 128], strides = [1, 1]} : vector<16x256xf32> to vector<16x128xf32>
    %78 = vector.extract_strided_slice %64 {offsets = [0, 256], sizes = [16, 128], strides = [1, 1]} : vector<16x384xf32> to vector<16x128xf32>
    %79 = vector.extract_strided_slice %65 {offsets = [0, 256], sizes = [16, 128], strides = [1, 1]} : vector<16x384xf32> to vector<16x128xf32>
    %80 = arith.addf %79, %12 : vector<16x128xf32>
    %81 = arith.mulf %76, %80 : vector<16x128xf32>
    %82 = arith.addf %78, %81 : vector<16x128xf32>
    %83 = math.tanh %82 : vector<16x128xf32>
    %cst_28 = arith.constant 1.000000e+00 : f32
    %84 = vector.broadcast %cst_28 : f32 to vector<16x128xf32>
    %85 = arith.subf %84, %77 : vector<16x128xf32>
    %86 = arith.mulf %85, %83 : vector<16x128xf32>
    %87 = arith.mulf %77, %63 : vector<16x128xf32>
    %88 = arith.addf %86, %87 : vector<16x128xf32>
    %c48 = arith.constant 48 : index
    %c0_29 = arith.constant 0 : index
    %89 = vector.load %arg5[%c48, %c0_29] : memref<128x384xf32, #tpu.memory_space<vmem>>, vector<16x384xf32>
    %cst_30 = arith.constant dense<0.000000e+00> : vector<16x384xf32>
    %90 = tpu.matmul %88, %9, %cst_30 {dimension_numbers = #tpu.dot_dimension_numbers<[1], [0], [0], [1], [0, 0, 1, 1], [], []>} : vector<16x128xf32>, vector<128x384xf32>, vector<16x384xf32> -> vector<16x384xf32>
    %91 = vector.extract_strided_slice %89 {offsets = [0, 0], sizes = [16, 256], strides = [1, 1]} : vector<16x384xf32> to vector<16x256xf32>
    %92 = vector.extract_strided_slice %90 {offsets = [0, 0], sizes = [16, 256], strides = [1, 1]} : vector<16x384xf32> to vector<16x256xf32>
    %93 = arith.addf %91, %92 : vector<16x256xf32>
    %cst_31 = arith.constant 5.000000e-01 : f32
    %94 = vector.broadcast %cst_31 : f32 to vector<16x256xf32>
    %95 = arith.mulf %94, %93 : vector<16x256xf32>
    %96 = math.tanh %95 : vector<16x256xf32>
    %cst_32 = arith.constant 5.000000e-01 : f32
    %97 = vector.broadcast %cst_32 : f32 to vector<16x256xf32>
    %98 = arith.mulf %97, %96 : vector<16x256xf32>
    %cst_33 = arith.constant 5.000000e-01 : f32
    %99 = vector.broadcast %cst_33 : f32 to vector<16x256xf32>
    %100 = arith.addf %98, %99 : vector<16x256xf32>
    %101 = vector.extract_strided_slice %100 {offsets = [0, 0], sizes = [16, 128], strides = [1, 1]} : vector<16x256xf32> to vector<16x128xf32>
    %102 = vector.extract_strided_slice %100 {offsets = [0, 128], sizes = [16, 128], strides = [1, 1]} : vector<16x256xf32> to vector<16x128xf32>
    %103 = vector.extract_strided_slice %89 {offsets = [0, 256], sizes = [16, 128], strides = [1, 1]} : vector<16x384xf32> to vector<16x128xf32>
    %104 = vector.extract_strided_slice %90 {offsets = [0, 256], sizes = [16, 128], strides = [1, 1]} : vector<16x384xf32> to vector<16x128xf32>
    %105 = arith.addf %104, %12 : vector<16x128xf32>
    %106 = arith.mulf %101, %105 : vector<16x128xf32>
    %107 = arith.addf %103, %106 : vector<16x128xf32>
    %108 = math.tanh %107 : vector<16x128xf32>
    %cst_34 = arith.constant 1.000000e+00 : f32
    %109 = vector.broadcast %cst_34 : f32 to vector<16x128xf32>
    %110 = arith.subf %109, %102 : vector<16x128xf32>
    %111 = arith.mulf %110, %108 : vector<16x128xf32>
    %112 = arith.mulf %102, %88 : vector<16x128xf32>
    %113 = arith.addf %111, %112 : vector<16x128xf32>
    %c64 = arith.constant 64 : index
    %c0_35 = arith.constant 0 : index
    %114 = vector.load %arg5[%c64, %c0_35] : memref<128x384xf32, #tpu.memory_space<vmem>>, vector<16x384xf32>
    %cst_36 = arith.constant dense<0.000000e+00> : vector<16x384xf32>
    %115 = tpu.matmul %113, %9, %cst_36 {dimension_numbers = #tpu.dot_dimension_numbers<[1], [0], [0], [1], [0, 0, 1, 1], [], []>} : vector<16x128xf32>, vector<128x384xf32>, vector<16x384xf32> -> vector<16x384xf32>
    %116 = vector.extract_strided_slice %114 {offsets = [0, 0], sizes = [16, 256], strides = [1, 1]} : vector<16x384xf32> to vector<16x256xf32>
    %117 = vector.extract_strided_slice %115 {offsets = [0, 0], sizes = [16, 256], strides = [1, 1]} : vector<16x384xf32> to vector<16x256xf32>
    %118 = arith.addf %116, %117 : vector<16x256xf32>
    %cst_37 = arith.constant 5.000000e-01 : f32
    %119 = vector.broadcast %cst_37 : f32 to vector<16x256xf32>
    %120 = arith.mulf %119, %118 : vector<16x256xf32>
    %121 = math.tanh %120 : vector<16x256xf32>
    %cst_38 = arith.constant 5.000000e-01 : f32
    %122 = vector.broadcast %cst_38 : f32 to vector<16x256xf32>
    %123 = arith.mulf %122, %121 : vector<16x256xf32>
    %cst_39 = arith.constant 5.000000e-01 : f32
    %124 = vector.broadcast %cst_39 : f32 to vector<16x256xf32>
    %125 = arith.addf %123, %124 : vector<16x256xf32>
    %126 = vector.extract_strided_slice %125 {offsets = [0, 0], sizes = [16, 128], strides = [1, 1]} : vector<16x256xf32> to vector<16x128xf32>
    %127 = vector.extract_strided_slice %125 {offsets = [0, 128], sizes = [16, 128], strides = [1, 1]} : vector<16x256xf32> to vector<16x128xf32>
    %128 = vector.extract_strided_slice %114 {offsets = [0, 256], sizes = [16, 128], strides = [1, 1]} : vector<16x384xf32> to vector<16x128xf32>
    %129 = vector.extract_strided_slice %115 {offsets = [0, 256], sizes = [16, 128], strides = [1, 1]} : vector<16x384xf32> to vector<16x128xf32>
    %130 = arith.addf %129, %12 : vector<16x128xf32>
    %131 = arith.mulf %126, %130 : vector<16x128xf32>
    %132 = arith.addf %128, %131 : vector<16x128xf32>
    %133 = math.tanh %132 : vector<16x128xf32>
    %cst_40 = arith.constant 1.000000e+00 : f32
    %134 = vector.broadcast %cst_40 : f32 to vector<16x128xf32>
    %135 = arith.subf %134, %127 : vector<16x128xf32>
    %136 = arith.mulf %135, %133 : vector<16x128xf32>
    %137 = arith.mulf %127, %113 : vector<16x128xf32>
    %138 = arith.addf %136, %137 : vector<16x128xf32>
    %c80 = arith.constant 80 : index
    %c0_41 = arith.constant 0 : index
    %139 = vector.load %arg5[%c80, %c0_41] : memref<128x384xf32, #tpu.memory_space<vmem>>, vector<16x384xf32>
    %cst_42 = arith.constant dense<0.000000e+00> : vector<16x384xf32>
    %140 = tpu.matmul %138, %9, %cst_42 {dimension_numbers = #tpu.dot_dimension_numbers<[1], [0], [0], [1], [0, 0, 1, 1], [], []>} : vector<16x128xf32>, vector<128x384xf32>, vector<16x384xf32> -> vector<16x384xf32>
    %141 = vector.extract_strided_slice %139 {offsets = [0, 0], sizes = [16, 256], strides = [1, 1]} : vector<16x384xf32> to vector<16x256xf32>
    %142 = vector.extract_strided_slice %140 {offsets = [0, 0], sizes = [16, 256], strides = [1, 1]} : vector<16x384xf32> to vector<16x256xf32>
    %143 = arith.addf %141, %142 : vector<16x256xf32>
    %cst_43 = arith.constant 5.000000e-01 : f32
    %144 = vector.broadcast %cst_43 : f32 to vector<16x256xf32>
    %145 = arith.mulf %144, %143 : vector<16x256xf32>
    %146 = math.tanh %145 : vector<16x256xf32>
    %cst_44 = arith.constant 5.000000e-01 : f32
    %147 = vector.broadcast %cst_44 : f32 to vector<16x256xf32>
    %148 = arith.mulf %147, %146 : vector<16x256xf32>
    %cst_45 = arith.constant 5.000000e-01 : f32
    %149 = vector.broadcast %cst_45 : f32 to vector<16x256xf32>
    %150 = arith.addf %148, %149 : vector<16x256xf32>
    %151 = vector.extract_strided_slice %150 {offsets = [0, 0], sizes = [16, 128], strides = [1, 1]} : vector<16x256xf32> to vector<16x128xf32>
    %152 = vector.extract_strided_slice %150 {offsets = [0, 128], sizes = [16, 128], strides = [1, 1]} : vector<16x256xf32> to vector<16x128xf32>
    %153 = vector.extract_strided_slice %139 {offsets = [0, 256], sizes = [16, 128], strides = [1, 1]} : vector<16x384xf32> to vector<16x128xf32>
    %154 = vector.extract_strided_slice %140 {offsets = [0, 256], sizes = [16, 128], strides = [1, 1]} : vector<16x384xf32> to vector<16x128xf32>
    %155 = arith.addf %154, %12 : vector<16x128xf32>
    %156 = arith.mulf %151, %155 : vector<16x128xf32>
    %157 = arith.addf %153, %156 : vector<16x128xf32>
    %158 = math.tanh %157 : vector<16x128xf32>
    %cst_46 = arith.constant 1.000000e+00 : f32
    %159 = vector.broadcast %cst_46 : f32 to vector<16x128xf32>
    %160 = arith.subf %159, %152 : vector<16x128xf32>
    %161 = arith.mulf %160, %158 : vector<16x128xf32>
    %162 = arith.mulf %152, %138 : vector<16x128xf32>
    %163 = arith.addf %161, %162 : vector<16x128xf32>
    %c96 = arith.constant 96 : index
    %c0_47 = arith.constant 0 : index
    %164 = vector.load %arg5[%c96, %c0_47] : memref<128x384xf32, #tpu.memory_space<vmem>>, vector<16x384xf32>
    %cst_48 = arith.constant dense<0.000000e+00> : vector<16x384xf32>
    %165 = tpu.matmul %163, %9, %cst_48 {dimension_numbers = #tpu.dot_dimension_numbers<[1], [0], [0], [1], [0, 0, 1, 1], [], []>} : vector<16x128xf32>, vector<128x384xf32>, vector<16x384xf32> -> vector<16x384xf32>
    %166 = vector.extract_strided_slice %164 {offsets = [0, 0], sizes = [16, 256], strides = [1, 1]} : vector<16x384xf32> to vector<16x256xf32>
    %167 = vector.extract_strided_slice %165 {offsets = [0, 0], sizes = [16, 256], strides = [1, 1]} : vector<16x384xf32> to vector<16x256xf32>
    %168 = arith.addf %166, %167 : vector<16x256xf32>
    %cst_49 = arith.constant 5.000000e-01 : f32
    %169 = vector.broadcast %cst_49 : f32 to vector<16x256xf32>
    %170 = arith.mulf %169, %168 : vector<16x256xf32>
    %171 = math.tanh %170 : vector<16x256xf32>
    %cst_50 = arith.constant 5.000000e-01 : f32
    %172 = vector.broadcast %cst_50 : f32 to vector<16x256xf32>
    %173 = arith.mulf %172, %171 : vector<16x256xf32>
    %cst_51 = arith.constant 5.000000e-01 : f32
    %174 = vector.broadcast %cst_51 : f32 to vector<16x256xf32>
    %175 = arith.addf %173, %174 : vector<16x256xf32>
    %176 = vector.extract_strided_slice %175 {offsets = [0, 0], sizes = [16, 128], strides = [1, 1]} : vector<16x256xf32> to vector<16x128xf32>
    %177 = vector.extract_strided_slice %175 {offsets = [0, 128], sizes = [16, 128], strides = [1, 1]} : vector<16x256xf32> to vector<16x128xf32>
    %178 = vector.extract_strided_slice %164 {offsets = [0, 256], sizes = [16, 128], strides = [1, 1]} : vector<16x384xf32> to vector<16x128xf32>
    %179 = vector.extract_strided_slice %165 {offsets = [0, 256], sizes = [16, 128], strides = [1, 1]} : vector<16x384xf32> to vector<16x128xf32>
    %180 = arith.addf %179, %12 : vector<16x128xf32>
    %181 = arith.mulf %176, %180 : vector<16x128xf32>
    %182 = arith.addf %178, %181 : vector<16x128xf32>
    %183 = math.tanh %182 : vector<16x128xf32>
    %cst_52 = arith.constant 1.000000e+00 : f32
    %184 = vector.broadcast %cst_52 : f32 to vector<16x128xf32>
    %185 = arith.subf %184, %177 : vector<16x128xf32>
    %186 = arith.mulf %185, %183 : vector<16x128xf32>
    %187 = arith.mulf %177, %163 : vector<16x128xf32>
    %188 = arith.addf %186, %187 : vector<16x128xf32>
    %c112 = arith.constant 112 : index
    %c0_53 = arith.constant 0 : index
    %189 = vector.load %arg5[%c112, %c0_53] : memref<128x384xf32, #tpu.memory_space<vmem>>, vector<16x384xf32>
    %cst_54 = arith.constant dense<0.000000e+00> : vector<16x384xf32>
    %190 = tpu.matmul %188, %9, %cst_54 {dimension_numbers = #tpu.dot_dimension_numbers<[1], [0], [0], [1], [0, 0, 1, 1], [], []>} : vector<16x128xf32>, vector<128x384xf32>, vector<16x384xf32> -> vector<16x384xf32>
    %191 = vector.extract_strided_slice %189 {offsets = [0, 0], sizes = [16, 256], strides = [1, 1]} : vector<16x384xf32> to vector<16x256xf32>
    %192 = vector.extract_strided_slice %190 {offsets = [0, 0], sizes = [16, 256], strides = [1, 1]} : vector<16x384xf32> to vector<16x256xf32>
    %193 = arith.addf %191, %192 : vector<16x256xf32>
    %cst_55 = arith.constant 5.000000e-01 : f32
    %194 = vector.broadcast %cst_55 : f32 to vector<16x256xf32>
    %195 = arith.mulf %194, %193 : vector<16x256xf32>
    %196 = math.tanh %195 : vector<16x256xf32>
    %cst_56 = arith.constant 5.000000e-01 : f32
    %197 = vector.broadcast %cst_56 : f32 to vector<16x256xf32>
    %198 = arith.mulf %197, %196 : vector<16x256xf32>
    %cst_57 = arith.constant 5.000000e-01 : f32
    %199 = vector.broadcast %cst_57 : f32 to vector<16x256xf32>
    %200 = arith.addf %198, %199 : vector<16x256xf32>
    %201 = vector.extract_strided_slice %200 {offsets = [0, 0], sizes = [16, 128], strides = [1, 1]} : vector<16x256xf32> to vector<16x128xf32>
    %202 = vector.extract_strided_slice %200 {offsets = [0, 128], sizes = [16, 128], strides = [1, 1]} : vector<16x256xf32> to vector<16x128xf32>
    %203 = vector.extract_strided_slice %189 {offsets = [0, 256], sizes = [16, 128], strides = [1, 1]} : vector<16x384xf32> to vector<16x128xf32>
    %204 = vector.extract_strided_slice %190 {offsets = [0, 256], sizes = [16, 128], strides = [1, 1]} : vector<16x384xf32> to vector<16x128xf32>
    %205 = arith.addf %204, %12 : vector<16x128xf32>
    %206 = arith.mulf %201, %205 : vector<16x128xf32>
    %207 = arith.addf %203, %206 : vector<16x128xf32>
    %208 = math.tanh %207 : vector<16x128xf32>
    %cst_58 = arith.constant 1.000000e+00 : f32
    %209 = vector.broadcast %cst_58 : f32 to vector<16x128xf32>
    %210 = arith.subf %209, %202 : vector<16x128xf32>
    %211 = arith.mulf %210, %208 : vector<16x128xf32>
    %212 = arith.mulf %202, %188 : vector<16x128xf32>
    %213 = arith.addf %211, %212 : vector<16x128xf32>
    %c1 = arith.constant 1 : index
    %c0_59 = arith.constant 0 : index
    %214 = vector.load %arg3[%c1, %c0_59] : memref<3x128xf32, #tpu.memory_space<vmem>>, vector<1x128xf32>
    %215 = vector.broadcast %214 : vector<1x128xf32> to vector<16x128xf32>
    %216 = arith.mulf %213, %215 : vector<16x128xf32>
    %cst_60 = arith.constant dense<0.000000e+00> : vector<16xf32>
    %217 = vector.multi_reduction <add>, %216, %cst_60 [1] : vector<16x128xf32> to vector<16xf32>
    %218 = vector.shape_cast %217 : vector<16xf32> to vector<16x1xf32>
    %c2 = arith.constant 2 : index
    %c0_61 = arith.constant 0 : index
    %219 = vector.load %arg3[%c2, %c0_61] : memref<3x128xf32, #tpu.memory_space<vmem>>, vector<1x1xf32>
    %220 = vector.broadcast %219 : vector<1x1xf32> to vector<16x1xf32>
    %221 = arith.addf %218, %220 : vector<16x1xf32>
    %c0_62 = arith.constant 0 : index
    %c0_63 = arith.constant 0 : index
    %222 = vector.load %arg4[%c0_62, %c0_63] : memref<16x1xf32, #tpu.memory_space<vmem>>, vector<16x1xf32>
    tpu.vector_store %arg4[%c0_62, %c0_63], %221 {strides = array<i32>} : memref<16x1xf32, #tpu.memory_space<vmem>>, vector<16x1xf32>,
    return
  }
}

</mosaic_0001>

<llo_original>
// kernel: text_classifier_forward.1
$region0: #{text_classifier_forward.1}
  #allocation0 [shape = 'u32[]', space=smem, size = 0x4, offset = 0x4, fixed_abs, tag = 'smem constant byte address 0x4 - core index']
  #allocation1 [shape = 'u32[72,128]{1,0:T(1,128)}', space=vmem, size = 0x9000, scoped, tag = 'internal scratch']
  #allocation2 [shape = 'f32[128,384]{1,0:T(8,128)}', space=vmem, size = 0x30000, scoped, tag = 'scratch operand']
  %s0 = inlined_call_operand.vmem [shape: s32[128,1], index: 0, kind: input, shape index: {}]
  %s1 = inlined_call_operand.hbm [shape: f32[64,384], index: 1, kind: input, shape index: {}]
  %s2 = inlined_call_operand.hbm [shape: f32[128,384], index: 2, kind: input, shape index: {}]
  %s3 = inlined_call_operand.vmem [shape: f32[3,128], index: 3, kind: input, shape index: {}]
  %s4 = inlined_call_operand.vmem [shape: f32[16,1], index: 4, kind: output, shape index: {}]
  %s5 = sld [smem:[#allocation0]]
  $region34: #{text_classifier_forward.1} parent=0
    _
  %s7 = ssub.s32 1, %s5
  %s8 = scalar_select 0, %s7, %s5
  $region1: #{text_classifier_forward.1} parent=0
    #allocation3 [shape = 'u8[98304]{0}', space=vmem, size = 0x18000, scoped, tag = 'input window, operand 1, single buffered']
    #allocation4 [shape = 's32[1]{0}', space=sflag, size = 0x4, scoped, tag = 'scoped memory for text_classifier_forward.1']
    #allocation5 [shape = 'u8[196608]{0}', space=vmem, size = 0x30000, scoped, tag = 'input window, operand 2, single buffered']
    #allocation6 [shape = 's32[1]{0}', space=sflag, size = 0x4, scoped, tag = 'scoped memory for text_classifier_forward.1']
    %9 = vsyncpa [#allocation4], 0
    %10 = vsyncpa [#allocation6], 0
    // Predicated region
    $region2: #{text_classifier_forward.1} parent=1 // pred_check
      _
    $region3: #{text_classifier_forward.1} parent=1 // pred_check_branch
      %12 = sbr.rel (0) target = $region5
    $region4: #{text_classifier_forward.1} parent=1 // pred_region
      _
    $region5: #{text_classifier_forward.1} parent=1 // pred_fallthru
      _
    // Predicated region
    $region6: #{text_classifier_forward.1} parent=1 // pred_check
      _
    $region7: #{text_classifier_forward.1} parent=1 // pred_check_branch
      %14 = sbr.rel (0) target = $region9
    $region8: #{text_classifier_forward.1} parent=1 // pred_region
      %16 = vsyncadd [#allocation4], 0
      %s17 = sshll.u32 %s1, 4
      %s18 = int_to_ptr.hbm [resolvable:$true] %s17
      %s19 = sshll.u32 [#allocation3], 4
      %s20 = int_to_ptr.vmem [resolvable:$true] %s19
      %25 = dma.hbm_to_vmem [thread:$0]  %s18, 3072, %s20, [#allocation4], 384, 384, 24
    $region9: #{text_classifier_forward.1} parent=1 // pred_fallthru
      _
    // Predicated region
    $region10: #{text_classifier_forward.1} parent=1 // pred_check
      _
    $region11: #{text_classifier_forward.1} parent=1 // pred_check_branch
      %27 = sbr.rel (0) target = $region13
    $region12: #{text_classifier_forward.1} parent=1 // pred_region
      %29 = vsyncadd [#allocation6], 0
      %s30 = sshll.u32 %s2, 4
      %s31 = int_to_ptr.hbm [resolvable:$true] %s30
      %s32 = sshll.u32 [#allocation5], 4
      %s33 = int_to_ptr.vmem [resolvable:$true] %s32
      %38 = dma.hbm_to_vmem [thread:$0]  %s31, 6144, %s33, [#allocation6], 384, 384, 24
    $region13: #{text_classifier_forward.1} parent=1 // pred_fallthru
      _
    // Predicated region
    $region14: #{text_classifier_forward.1} parent=1 // pred_check
      _
    $region15: #{text_classifier_forward.1} parent=1 // pred_check_branch
      %40 = sbr.rel (0) target = $region17
    $region16: #{text_classifier_forward.1} parent=1 // pred_region
      _
    $region17: #{text_classifier_forward.1} parent=1 // pred_fallthru
      _
    // Predicated region
    $region18: #{text_classifier_forward.1} parent=1 // pred_check
      _
    $region19: #{text_classifier_forward.1} parent=1 // pred_check_branch
      %42 = sbr.rel (0) target = $region21
    $region20: #{text_classifier_forward.1} parent=1 // pred_region
      %44 = dma.done [#allocation4], 3072
    $region21: #{text_classifier_forward.1} parent=1 // pred_fallthru
      _
    // Predicated region
    $region22: #{text_classifier_forward.1} parent=1 // pred_check
      _
    $region23: #{text_classifier_forward.1} parent=1 // pred_check_branch
      %46 = sbr.rel (0) target = $region25
    $region24: #{text_classifier_forward.1} parent=1 // pred_region
      %48 = dma.done [#allocation6], 6144
    $region25: #{text_classifier_forward.1} parent=1 // pred_fallthru
      _
    %v49 = vld [vmem:[%s0] sm:$0xff]
    %v50 = vld [vmem:[%s0 + $0x8] sm:$0xff]
    %v51 = vld [vmem:[%s0 + $0x10] sm:$0xff]
    %v52 = vld [vmem:[%s0 + $0x18] sm:$0xff]
    %v53 = vld [vmem:[%s0 + $0x20] sm:$0xff]
    %v54 = vld [vmem:[%s0 + $0x28] sm:$0xff]
    %v55 = vld [vmem:[%s0 + $0x30] sm:$0xff]
    %v56 = vld [vmem:[%s0 + $0x38] sm:$0xff]
    %v57 = vld [vmem:[%s0 + $0x40] sm:$0xff]
    %v58 = vld [vmem:[%s0 + $0x48] sm:$0xff]
    %v59 = vld [vmem:[%s0 + $0x50] sm:$0xff]
    %v60 = vld [vmem:[%s0 + $0x58] sm:$0xff]
    %v61 = vld [vmem:[%s0 + $0x60] sm:$0xff]
    %v62 = vld [vmem:[%s0 + $0x68] sm:$0xff]
    %v63 = vld [vmem:[%s0 + $0x70] sm:$0xff]
    %v64 = vld [vmem:[%s0 + $0x78] sm:$0xff]
    %v65 = vlaneseq
    %v66 = vand.u32 %v65, 127
    %67 = vset.pattern.permute.xlu0 0
    %68 = vperm.xlu0 %67, %v49
    %v69 = vpop.permute.xlu0 %68
    %70 = vset.pattern.permute.xlu0 0
    %71 = vperm.xlu0 %70, %v50
    %v72 = vpop.permute.xlu0 %71
    %73 = vset.pattern.permute.xlu0 0
    %74 = vperm.xlu0 %73, %v51
    %v75 = vpop.permute.xlu0 %74
    %76 = vset.pattern.permute.xlu0 0
    %77 = vperm.xlu0 %76, %v52
    %v78 = vpop.permute.xlu0 %77
    %79 = vset.pattern.permute.xlu0 0
    %80 = vperm.xlu0 %79, %v53
    %v81 = vpop.permute.xlu0 %80
    %82 = vset.pattern.permute.xlu0 0
    %83 = vperm.xlu0 %82, %v54
    %v84 = vpop.permute.xlu0 %83
    %85 = vset.pattern.permute.xlu0 0
    %86 = vperm.xlu0 %85, %v55
    %v87 = vpop.permute.xlu0 %86
    %88 = vset.pattern.permute.xlu0 0
    %89 = vperm.xlu0 %88, %v56
    %v90 = vpop.permute.xlu0 %89
    %91 = vset.pattern.permute.xlu0 0
    %92 = vperm.xlu0 %91, %v57
    %v93 = vpop.permute.xlu0 %92
    %94 = vset.pattern.permute.xlu0 0
    %95 = vperm.xlu0 %94, %v58
    %v96 = vpop.permute.xlu0 %95
    %97 = vset.pattern.permute.xlu0 0
    %98 = vperm.xlu0 %97, %v59
    %v99 = vpop.permute.xlu0 %98
    %100 = vset.pattern.permute.xlu0 0
    %101 = vperm.xlu0 %100, %v60
    %v102 = vpop.permute.xlu0 %101
    %103 = vset.pattern.permute.xlu0 0
    %104 = vperm.xlu0 %103, %v61
    %v105 = vpop.permute.xlu0 %104
    %106 = vset.pattern.permute.xlu0 0
    %107 = vperm.xlu0 %106, %v62
    %v108 = vpop.permute.xlu0 %107
    %109 = vset.pattern.permute.xlu0 0
    %110 = vperm.xlu0 %109, %v63
    %v111 = vpop.permute.xlu0 %110
    %112 = vset.pattern.permute.xlu0 0
    %113 = vperm.xlu0 %112, %v64
    %v114 = vpop.permute.xlu0 %113
    %vm115 = vcmp.eq.s32.totalorder %v69, %v66
    %vm116 = vcmp.eq.s32.totalorder %v72, %v66
    %vm117 = vcmp.eq.s32.totalorder %v75, %v66
    %vm118 = vcmp.eq.s32.totalorder %v78, %v66
    %vm119 = vcmp.eq.s32.totalorder %v81, %v66
    %vm120 = vcmp.eq.s32.totalorder %v84, %v66
    %vm121 = vcmp.eq.s32.totalorder %v87, %v66
    %vm122 = vcmp.eq.s32.totalorder %v90, %v66
    %vm123 = vcmp.eq.s32.totalorder %v93, %v66
    %vm124 = vcmp.eq.s32.totalorder %v96, %v66
    %vm125 = vcmp.eq.s32.totalorder %v99, %v66
    %vm126 = vcmp.eq.s32.totalorder %v102, %v66
    %vm127 = vcmp.eq.s32.totalorder %v105, %v66
    %vm128 = vcmp.eq.s32.totalorder %v108, %v66
    %vm129 = vcmp.eq.s32.totalorder %v111, %v66
    %vm130 = vcmp.eq.s32.totalorder %v114, %v66
    %v131 = vsel %vm115, 1, 0
    %v132 = vsel %vm116, 1, 0
    %v133 = vsel %vm117, 1, 0
    %v134 = vsel %vm118, 1, 0
    %v135 = vsel %vm119, 1, 0
    %v136 = vsel %vm120, 1, 0
    %v137 = vsel %vm121, 1, 0
    %v138 = vsel %vm122, 1, 0
    %v139 = vsel %vm123, 1, 0
    %v140 = vsel %vm124, 1, 0
    %v141 = vsel %vm125, 1, 0
    %v142 = vsel %vm126, 1, 0
    %v143 = vsel %vm127, 1, 0
    %v144 = vsel %vm128, 1, 0
    %v145 = vsel %vm129, 1, 0
    %v146 = vsel %vm130, 1, 0
    %v147 = vcvt.s32.f32 %v131
    %v148 = vcvt.s32.f32 %v132
    %v149 = vcvt.s32.f32 %v133
    %v150 = vcvt.s32.f32 %v134
    %v151 = vcvt.s32.f32 %v135
    %v152 = vcvt.s32.f32 %v136
    %v153 = vcvt.s32.f32 %v137
    %v154 = vcvt.s32.f32 %v138
    %v155 = vcvt.s32.f32 %v139
    %v156 = vcvt.s32.f32 %v140
    %v157 = vcvt.s32.f32 %v141
    %v158 = vcvt.s32.f32 %v142
    %v159 = vcvt.s32.f32 %v143
    %v160 = vcvt.s32.f32 %v144
    %v161 = vcvt.s32.f32 %v145
    %v162 = vcvt.s32.f32 %v146
    %v163 = vld [vmem:[#allocation3] sm:$0xff]
    %v164 = vld [vmem:[#allocation3 + $0x8] sm:$0xff]
    %v165 = vld [vmem:[#allocation3 + $0x10] sm:$0xff]
    %v166 = vld [vmem:[#allocation3 + $0x18] sm:$0xff]
    %v167 = vld [vmem:[#allocation3 + $0x20] sm:$0xff]
    %v168 = vld [vmem:[#allocation3 + $0x28] sm:$0xff]
    %v169 = vld [vmem:[#allocation3 + $0x30] sm:$0xff]
    %v170 = vld [vmem:[#allocation3 + $0x38] sm:$0xff]
    %v171 = vld [vmem:[#allocation3 + $0x40] sm:$0xff]
    %v172 = vld [vmem:[#allocation3 + $0x48] sm:$0xff]
    %v173 = vld [vmem:[#allocation3 + $0x50] sm:$0xff]
    %v174 = vld [vmem:[#allocation3 + $0x58] sm:$0xff]
    %v175 = vld [vmem:[#allocation3 + $0x60] sm:$0xff]
    %v176 = vld [vmem:[#allocation3 + $0x68] sm:$0xff]
    %v177 = vld [vmem:[#allocation3 + $0x70] sm:$0xff]
    %v178 = vld [vmem:[#allocation3 + $0x78] sm:$0xff]
    %v179 = vld [vmem:[#allocation3 + $0x80] sm:$0xff]
    %v180 = vld [vmem:[#allocation3 + $0x88] sm:$0xff]
    %v181 = vld [vmem:[#allocation3 + $0x90] sm:$0xff]
    %v182 = vld [vmem:[#allocation3 + $0x98] sm:$0xff]
    %v183 = vld [vmem:[#allocation3 + $0xa0] sm:$0xff]
    %v184 = vld [vmem:[#allocation3 + $0xa8] sm:$0xff]
    %v185 = vld [vmem:[#allocation3 + $0xb0] sm:$0xff]
    %v186 = vld [vmem:[#allocation3 + $0xb8] sm:$0xff]
    %vm187 = vcmask 523264
    %v189 = vsel %vm187, %v147, 0
    %v192 = vsel %vm187, %v148, 0
    %v195 = vsel %vm187, %v149, 0
    %v198 = vsel %vm187, %v150, 0
    %v201 = vsel %vm187, %v151, 0
    %v204 = vsel %vm187, %v152, 0
    %v207 = vsel %vm187, %v153, 0
    %v210 = vsel %vm187, %v154, 0
    %v213 = vsel %vm187, %v155, 0
    %v216 = vsel %vm187, %v156, 0
    %v219 = vsel %vm187, %v157, 0
    %v222 = vsel %vm187, %v158, 0
    %v225 = vsel %vm187, %v159, 0
    %v228 = vsel %vm187, %v160, 0
    %v231 = vsel %vm187, %v161, 0
    %v234 = vsel %vm187, %v162, 0
    %236 = vmatpush.msra.mxu0 0.0
    %237 = vmatpush.msra.mxu0 0.0
    %238 = vmatpush.msra.mxu0 0.0
    %239 = vmatpush.msra.mxu0 0.0
    %240 = vmatpush.msra.mxu0 0.0
    %241 = vmatpush.msra.mxu0 0.0
    %242 = vmatpush.msra.mxu0 0.0
    %243 = vmatpush.msra.mxu0 0.0
    %244 = vmatpush.msra.mxu0 %v184
    %245 = vmatpush.msra.mxu0 %v181
    %246 = vmatpush.msra.mxu0 %v178
    %247 = vmatpush.msra.mxu0 %v175
    %248 = vmatpush.msra.mxu0 %v172
    %249 = vmatpush.msra.mxu0 %v169
    %250 = vmatpush.msra.mxu0 %v166
    %251 = vmatpush.msra.mxu0 %v163
    %252 = vmatmul.f32.gmra.mxu0 %v189
    %v253 = vpop.f32.mrf.mxu0
    %v254 = vadd.f32 0.0, %v253
    %255 = vmatmul.f32.gmra.mxu0 %v192
    %v256 = vpop.f32.mrf.mxu0
    %v257 = vadd.f32 0.0, %v256
    %258 = vmatmul.f32.gmra.mxu0 %v195
    %v259 = vpop.f32.mrf.mxu0
    %v260 = vadd.f32 0.0, %v259
    %261 = vmatmul.f32.gmra.mxu0 %v198
    %v262 = vpop.f32.mrf.mxu0
    %v263 = vadd.f32 0.0, %v262
    %264 = vmatmul.f32.gmra.mxu0 %v201
    %v265 = vpop.f32.mrf.mxu0
    %v266 = vadd.f32 0.0, %v265
    %267 = vmatmul.f32.gmra.mxu0 %v204
    %v268 = vpop.f32.mrf.mxu0
    %v269 = vadd.f32 0.0, %v268
    %270 = vmatmul.f32.gmra.mxu0 %v207
    %v271 = vpop.f32.mrf.mxu0
    %v272 = vadd.f32 0.0, %v271
    %273 = vmatmul.f32.gmra.mxu0 %v210
    %v274 = vpop.f32.mrf.mxu0
    %v275 = vadd.f32 0.0, %v274
    %276 = vmatmul.f32.gmra.mxu0 %v213
    %v277 = vpop.f32.mrf.mxu0
    %v278 = vadd.f32 0.0, %v277
    %279 = vmatmul.f32.gmra.mxu0 %v216
    %v280 = vpop.f32.mrf.mxu0
    %v281 = vadd.f32 0.0, %v280
    %282 = vmatmul.f32.gmra.mxu0 %v219
    %v283 = vpop.f32.mrf.mxu0
    %v284 = vadd.f32 0.0, %v283
    %285 = vmatmul.f32.gmra.mxu0 %v222
    %v286 = vpop.f32.mrf.mxu0
    %v287 = vadd.f32 0.0, %v286
    %288 = vmatmul.f32.gmra.mxu0 %v225
    %v289 = vpop.f32.mrf.mxu0
    %v290 = vadd.f32 0.0, %v289
    %291 = vmatmul.f32.gmra.mxu0 %v228
    %v292 = vpop.f32.mrf.mxu0
    %v293 = vadd.f32 0.0, %v292
    %294 = vmatmul.f32.gmra.mxu0 %v231
    %v295 = vpop.f32.mrf.mxu0
    %v296 = vadd.f32 0.0, %v295
    %297 = vmatmul.f32.gmra.mxu0 %v234
    %v298 = vpop.f32.mrf.mxu0
    %v299 = vadd.f32 0.0, %v298
    %300 = vdwg.mxu0
    %301 = vmatpush.msra.mxu0 0.0
    %302 = vmatpush.msra.mxu0 0.0
    %303 = vmatpush.msra.mxu0 0.0
    %304 = vmatpush.msra.mxu0 0.0
    %305 = vmatpush.msra.mxu0 0.0
    %306 = vmatpush.msra.mxu0 0.0
    %307 = vmatpush.msra.mxu0 0.0
    %308 = vmatpush.msra.mxu0 0.0
    %309 = vmatpush.msra.mxu0 %v185
    %310 = vmatpush.msra.mxu0 %v182
    %311 = vmatpush.msra.mxu0 %v179
    %312 = vmatpush.msra.mxu0 %v176
    %313 = vmatpush.msra.mxu0 %v173
    %314 = vmatpush.msra.mxu0 %v170
    %315 = vmatpush.msra.mxu0 %v167
    %316 = vmatpush.msra.mxu0 %v164
    %317 = vmatmul.f32.gmra.mxu0 %v189
    %v318 = vpop.f32.mrf.mxu0
    %v319 = vadd.f32 0.0, %v318
    %320 = vmatmul.f32.gmra.mxu0 %v192
    %v321 = vpop.f32.mrf.mxu0
    %v322 = vadd.f32 0.0, %v321
    %323 = vmatmul.f32.gmra.mxu0 %v195
    %v324 = vpop.f32.mrf.mxu0
    %v325 = vadd.f32 0.0, %v324
    %326 = vmatmul.f32.gmra.mxu0 %v198
    %v327 = vpop.f32.mrf.mxu0
    %v328 = vadd.f32 0.0, %v327
    %329 = vmatmul.f32.gmra.mxu0 %v201
    %v330 = vpop.f32.mrf.mxu0
    %v331 = vadd.f32 0.0, %v330
    %332 = vmatmul.f32.gmra.mxu0 %v204
    %v333 = vpop.f32.mrf.mxu0
    %v334 = vadd.f32 0.0, %v333
    %335 = vmatmul.f32.gmra.mxu0 %v207
    %v336 = vpop.f32.mrf.mxu0
    %v337 = vadd.f32 0.0, %v336
    %338 = vmatmul.f32.gmra.mxu0 %v210
    %v339 = vpop.f32.mrf.mxu0
    %v340 = vadd.f32 0.0, %v339
    %341 = vmatmul.f32.gmra.mxu0 %v213
    %v342 = vpop.f32.mrf.mxu0
    %v343 = vadd.f32 0.0, %v342
    %344 = vmatmul.f32.gmra.mxu0 %v216
    %v345 = vpop.f32.mrf.mxu0
    %v346 = vadd.f32 0.0, %v345
    %347 = vmatmul.f32.gmra.mxu0 %v219
    %v348 = vpop.f32.mrf.mxu0
    %v349 = vadd.f32 0.0, %v348
    %350 = vmatmul.f32.gmra.mxu0 %v222
    %v351 = vpop.f32.mrf.mxu0
    %v352 = vadd.f32 0.0, %v351
    %353 = vmatmul.f32.gmra.mxu0 %v225
    %v354 = vpop.f32.mrf.mxu0
    %v355 = vadd.f32 0.0, %v354
    %356 = vmatmul.f32.gmra.mxu0 %v228
    %v357 = vpop.f32.mrf.mxu0
    %v358 = vadd.f32 0.0, %v357
    %359 = vmatmul.f32.gmra.mxu0 %v231
    %v360 = vpop.f32.mrf.mxu0
    %v361 = vadd.f32 0.0, %v360
    %362 = vmatmul.f32.gmra.mxu0 %v234
    %v363 = vpop.f32.mrf.mxu0
    %v364 = vadd.f32 0.0, %v363
    %365 = vdwg.mxu0
    %366 = vmatpush.msra.mxu0 0.0
    %367 = vmatpush.msra.mxu0 0.0
    %368 = vmatpush.msra.mxu0 0.0
    %369 = vmatpush.msra.mxu0 0.0
    %370 = vmatpush.msra.mxu0 0.0
    %371 = vmatpush.msra.mxu0 0.0
    %372 = vmatpush.msra.mxu0 0.0
    %373 = vmatpush.msra.mxu0 0.0
    %374 = vmatpush.msra.mxu0 %v186
    %375 = vmatpush.msra.mxu0 %v183
    %376 = vmatpush.msra.mxu0 %v180
    %377 = vmatpush.msra.mxu0 %v177
    %378 = vmatpush.msra.mxu0 %v174
    %379 = vmatpush.msra.mxu0 %v171
    %380 = vmatpush.msra.mxu0 %v168
    %381 = vmatpush.msra.mxu0 %v165
    %382 = vmatmul.f32.gmra.mxu0 %v189
    %v383 = vpop.f32.mrf.mxu0
    %v384 = vadd.f32 0.0, %v383
    %385 = vmatmul.f32.gmra.mxu0 %v192
    %v386 = vpop.f32.mrf.mxu0
    %v387 = vadd.f32 0.0, %v386
    %388 = vmatmul.f32.gmra.mxu0 %v195
    %v389 = vpop.f32.mrf.mxu0
    %v390 = vadd.f32 0.0, %v389
    %391 = vmatmul.f32.gmra.mxu0 %v198
    %v392 = vpop.f32.mrf.mxu0
    %v393 = vadd.f32 0.0, %v392
    %394 = vmatmul.f32.gmra.mxu0 %v201
    %v395 = vpop.f32.mrf.mxu0
    %v396 = vadd.f32 0.0, %v395
    %397 = vmatmul.f32.gmra.mxu0 %v204
    %v398 = vpop.f32.mrf.mxu0
    %v399 = vadd.f32 0.0, %v398
    %400 = vmatmul.f32.gmra.mxu0 %v207
    %v401 = vpop.f32.mrf.mxu0
    %v402 = vadd.f32 0.0, %v401
    %403 = vmatmul.f32.gmra.mxu0 %v210
    %v404 = vpop.f32.mrf.mxu0
    %v405 = vadd.f32 0.0, %v404
    %406 = vmatmul.f32.gmra.mxu0 %v213
    %v407 = vpop.f32.mrf.mxu0
    %v408 = vadd.f32 0.0, %v407
    %409 = vmatmul.f32.gmra.mxu0 %v216
    %v410 = vpop.f32.mrf.mxu0
    %v411 = vadd.f32 0.0, %v410
    %412 = vmatmul.f32.gmra.mxu0 %v219
    %v413 = vpop.f32.mrf.mxu0
    %v414 = vadd.f32 0.0, %v413
    %415 = vmatmul.f32.gmra.mxu0 %v222
    %v416 = vpop.f32.mrf.mxu0
    %v417 = vadd.f32 0.0, %v416
    %418 = vmatmul.f32.gmra.mxu0 %v225
    %v419 = vpop.f32.mrf.mxu0
    %v420 = vadd.f32 0.0, %v419
    %421 = vmatmul.f32.gmra.mxu0 %v228
    %v422 = vpop.f32.mrf.mxu0
    %v423 = vadd.f32 0.0, %v422
    %424 = vmatmul.f32.gmra.mxu0 %v231
    %v425 = vpop.f32.mrf.mxu0
    %v426 = vadd.f32 0.0, %v425
    %427 = vmatmul.f32.gmra.mxu0 %v234
    %v428 = vpop.f32.mrf.mxu0
    %v429 = vadd.f32 0.0, %v428
    %430 = vdwg.mxu0
    %431 = vst [vmem:[#allocation2] sm:$0xff] %v254
    %432 = vst [vmem:[#allocation2 + $0x8] sm:$0xff] %v319
    %433 = vst [vmem:[#allocation2 + $0x10] sm:$0xff] %v384
    %434 = vst [vmem:[#allocation2 + $0x18] sm:$0xff] %v257
    %435 = vst [vmem:[#allocation2 + $0x20] sm:$0xff] %v322
    %436 = vst [vmem:[#allocation2 + $0x28] sm:$0xff] %v387
    %437 = vst [vmem:[#allocation2 + $0x30] sm:$0xff] %v260
    %438 = vst [vmem:[#allocation2 + $0x38] sm:$0xff] %v325
    %439 = vst [vmem:[#allocation2 + $0x40] sm:$0xff] %v390
    %440 = vst [vmem:[#allocation2 + $0x48] sm:$0xff] %v263
    %441 = vst [vmem:[#allocation2 + $0x50] sm:$0xff] %v328
    %442 = vst [vmem:[#allocation2 + $0x58] sm:$0xff] %v393
    %443 = vst [vmem:[#allocation2 + $0x60] sm:$0xff] %v266
    %444 = vst [vmem:[#allocation2 + $0x68] sm:$0xff] %v331
    %445 = vst [vmem:[#allocation2 + $0x70] sm:$0xff] %v396
    %446 = vst [vmem:[#allocation2 + $0x78] sm:$0xff] %v269
    %447 = vst [vmem:[#allocation2 + $0x80] sm:$0xff] %v334
    %448 = vst [vmem:[#allocation2 + $0x88] sm:$0xff] %v399
    %449 = vst [vmem:[#allocation2 + $0x90] sm:$0xff] %v272
    %450 = vst [vmem:[#allocation2 + $0x98] sm:$0xff] %v337
    %451 = vst [vmem:[#allocation2 + $0xa0] sm:$0xff] %v402
    %452 = vst [vmem:[#allocation2 + $0xa8] sm:$0xff] %v275
    %453 = vst [vmem:[#allocation2 + $0xb0] sm:$0xff] %v340
    %454 = vst [vmem:[#allocation2 + $0xb8] sm:$0xff] %v405
    %455 = vst [vmem:[#allocation2 + $0xc0] sm:$0xff] %v278
    %456 = vst [vmem:[#allocation2 + $0xc8] sm:$0xff] %v343
    %457 = vst [vmem:[#allocation2 + $0xd0] sm:$0xff] %v408
    %458 = vst [vmem:[#allocation2 + $0xd8] sm:$0xff] %v281
    %459 = vst [vmem:[#allocation2 + $0xe0] sm:$0xff] %v346
    %460 = vst [vmem:[#allocation2 + $0xe8] sm:$0xff] %v411
    %461 = vst [vmem:[#allocation2 + $0xf0] sm:$0xff] %v284
    %462 = vst [vmem:[#allocation2 + $0xf8] sm:$0xff] %v349
    %463 = vst [vmem:[#allocation2 + $0x100] sm:$0xff] %v414
    %464 = vst [vmem:[#allocation2 + $0x108] sm:$0xff] %v287
    %465 = vst [vmem:[#allocation2 + $0x110] sm:$0xff] %v352
    %466 = vst [vmem:[#allocation2 + $0x118] sm:$0xff] %v417
    %467 = vst [vmem:[#allocation2 + $0x120] sm:$0xff] %v290
    %468 = vst [vmem:[#allocation2 + $0x128] sm:$0xff] %v355
    %469 = vst [vmem:[#allocation2 + $0x130] sm:$0xff] %v420
    %470 = vst [vmem:[#allocation2 + $0x138] sm:$0xff] %v293
    %471 = vst [vmem:[#allocation2 + $0x140] sm:$0xff] %v358
    %472 = vst [vmem:[#allocation2 + $0x148] sm:$0xff] %v423
    %473 = vst [vmem:[#allocation2 + $0x150] sm:$0xff] %v296
    %474 = vst [vmem:[#allocation2 + $0x158] sm:$0xff] %v361
    %475 = vst [vmem:[#allocation2 + $0x160] sm:$0xff] %v426
    %476 = vst [vmem:[#allocation2 + $0x168] sm:$0xff] %v299
    %477 = vst [vmem:[#allocation2 + $0x170] sm:$0xff] %v364
    %478 = vst [vmem:[#allocation2 + $0x178] sm:$0xff] %v429
    %v479 = vld [vmem:[#allocation5] sm:$0xff]
    %v480 = vld [vmem:[#allocation5 + $0x8] sm:$0xff]
    %v481 = vld [vmem:[#allocation5 + $0x10] sm:$0xff]
    %v482 = vld [vmem:[#allocation5 + $0x18] sm:$0xff]
    %v483 = vld [vmem:[#allocation5 + $0x20] sm:$0xff]
    %v484 = vld [vmem:[#allocation5 + $0x28] sm:$0xff]
    %v485 = vld [vmem:[#allocation5 + $0x30] sm:$0xff]
    %v486 = vld [vmem:[#allocation5 + $0x38] sm:$0xff]
    %v487 = vld [vmem:[#allocation5 + $0x40] sm:$0xff]
    %v488 = vld [vmem:[#allocation5 + $0x48] sm:$0xff]
    %v489 = vld [vmem:[#allocation5 + $0x50] sm:$0xff]
    %v490 = vld [vmem:[#allocation5 + $0x58] sm:$0xff]
    %v491 = vld [vmem:[#allocation5 + $0x60] sm:$0xff]
    %v492 = vld [vmem:[#allocation5 + $0x68] sm:$0xff]
    %v493 = vld [vmem:[#allocation5 + $0x70] sm:$0xff]
    %v494 = vld [vmem:[#allocation5 + $0x78] sm:$0xff]
    %v495 = vld [vmem:[#allocation5 + $0x80] sm:$0xff]
    %v496 = vld [vmem:[#allocation5 + $0x88] sm:$0xff]
    %v497 = vld [vmem:[#allocation5 + $0x90] sm:$0xff]
    %v498 = vld [vmem:[#allocation5 + $0x98] sm:$0xff]
    %v499 = vld [vmem:[#allocation5 + $0xa0] sm:$0xff]
    %v500 = vld [vmem:[#allocation5 + $0xa8] sm:$0xff]
    %v501 = vld [vmem:[#allocation5 + $0xb0] sm:$0xff]
    %v502 = vld [vmem:[#allocation5 + $0xb8] sm:$0xff]
    %v503 = vld [vmem:[#allocation5 + $0xc0] sm:$0xff]
    %v504 = vld [vmem:[#allocation5 + $0xc8] sm:$0xff]
    %v505 = vld [vmem:[#allocation5 + $0xd0] sm:$0xff]
    %v506 = vld [vmem:[#allocation5 + $0xd8] sm:$0xff]
    %v507 = vld [vmem:[#allocation5 + $0xe0] sm:$0xff]
    %v508 = vld [vmem:[#allocation5 + $0xe8] sm:$0xff]
    %v509 = vld [vmem:[#allocation5 + $0xf0] sm:$0xff]
    %v510 = vld [vmem:[#allocation5 + $0xf8] sm:$0xff]
    %v511 = vld [vmem:[#allocation5 + $0x100] sm:$0xff]
    %v512 = vld [vmem:[#allocation5 + $0x108] sm:$0xff]
    %v513 = vld [vmem:[#allocation5 + $0x110] sm:$0xff]
    %v514 = vld [vmem:[#allocation5 + $0x118] sm:$0xff]
    %v515 = vld [vmem:[#allocation5 + $0x120] sm:$0xff]
    %v516 = vld [vmem:[#allocation5 + $0x128] sm:$0xff]
    %v517 = vld [vmem:[#allocation5 + $0x130] sm:$0xff]
    %v518 = vld [vmem:[#allocation5 + $0x138] sm:$0xff]
    %v519 = vld [vmem:[#allocation5 + $0x140] sm:$0xff]
    %v520 = vld [vmem:[#allocation5 + $0x148] sm:$0xff]
    %v521 = vld [vmem:[#allocation5 + $0x150] sm:$0xff]
    %v522 = vld [vmem:[#allocation5 + $0x158] sm:$0xff]
    %v523 = vld [vmem:[#allocation5 + $0x160] sm:$0xff]
    %v524 = vld [vmem:[#allocation5 + $0x168] sm:$0xff]
    %v525 = vld [vmem:[#allocation5 + $0x170] sm:$0xff]
    %v526 = vld [vmem:[#allocation5 + $0x178] sm:$0xff]
    %v527 = vld [vmem:[%s3] sm:$0x1]
    %v528 = vperm.slane %v527, 0
    %v529 = vld [vmem:[#allocation2] sm:$0xff]
    %v530 = vld [vmem:[#allocation2 + $0x8] sm:$0xff]
    %v531 = vld [vmem:[#allocation2 + $0x10] sm:$0xff]
    %v532 = vld [vmem:[#allocation2 + $0x18] sm:$0xff]
    %v533 = vld [vmem:[#allocation2 + $0x20] sm:$0xff]
    %v534 = vld [vmem:[#allocation2 + $0x28] sm:$0xff]
    %535 = vmatpush.msra.mxu0 %v524
    %536 = vmatpush.msra.mxu0 %v521
    %537 = vmatpush.msra.mxu0 %v518
    %538 = vmatpush.msra.mxu0 %v515
    %539 = vmatpush.msra.mxu0 %v512
    %540 = vmatpush.msra.mxu0 %v509
    %541 = vmatpush.msra.mxu0 %v506
    %542 = vmatpush.msra.mxu0 %v503
    %543 = vmatpush.msra.mxu0 %v500
    %544 = vmatpush.msra.mxu0 %v497
    %545 = vmatpush.msra.mxu0 %v494
    %546 = vmatpush.msra.mxu0 %v491
    %547 = vmatpush.msra.mxu0 %v488
    %548 = vmatpush.msra.mxu0 %v485
    %549 = vmatpush.msra.mxu0 %v482
    %550 = vmatpush.msra.mxu0 %v479
    %551 = vmatmul.f32.gmra.mxu0 0.0
    %v552 = vpop.f32.mrf.mxu0
    %v553 = vadd.f32 0.0, %v552
    %554 = vmatmul.f32.gmra.mxu0 0.0
    %v555 = vpop.f32.mrf.mxu0
    %v556 = vadd.f32 0.0, %v555
    %557 = vdwg.mxu0
    %558 = vmatpush.msra.mxu0 %v525
    %559 = vmatpush.msra.mxu0 %v522
    %560 = vmatpush.msra.mxu0 %v519
    %561 = vmatpush.msra.mxu0 %v516
    %562 = vmatpush.msra.mxu0 %v513
    %563 = vmatpush.msra.mxu0 %v510
    %564 = vmatpush.msra.mxu0 %v507
    %565 = vmatpush.msra.mxu0 %v504
    %566 = vmatpush.msra.mxu0 %v501
    %567 = vmatpush.msra.mxu0 %v498
    %568 = vmatpush.msra.mxu0 %v495
    %569 = vmatpush.msra.mxu0 %v492
    %570 = vmatpush.msra.mxu0 %v489
    %571 = vmatpush.msra.mxu0 %v486
    %572 = vmatpush.msra.mxu0 %v483
    %573 = vmatpush.msra.mxu0 %v480
    %574 = vmatmul.f32.gmra.mxu0 0.0
    %v575 = vpop.f32.mrf.mxu0
    %v576 = vadd.f32 0.0, %v575
    %577 = vmatmul.f32.gmra.mxu0 0.0
    %v578 = vpop.f32.mrf.mxu0
    %v579 = vadd.f32 0.0, %v578
    %580 = vdwg.mxu0
    %581 = vmatpush.msra.mxu0 %v526
    %582 = vmatpush.msra.mxu0 %v523
    %583 = vmatpush.msra.mxu0 %v520
    %584 = vmatpush.msra.mxu0 %v517
    %585 = vmatpush.msra.mxu0 %v514
    %586 = vmatpush.msra.mxu0 %v511
    %587 = vmatpush.msra.mxu0 %v508
    %588 = vmatpush.msra.mxu0 %v505
    %589 = vmatpush.msra.mxu0 %v502
    %590 = vmatpush.msra.mxu0 %v499
    %591 = vmatpush.msra.mxu0 %v496
    %592 = vmatpush.msra.mxu0 %v493
    %593 = vmatpush.msra.mxu0 %v490
    %594 = vmatpush.msra.mxu0 %v487
    %595 = vmatpush.msra.mxu0 %v484
    %596 = vmatpush.msra.mxu0 %v481
    %597 = vmatmul.f32.gmra.mxu0 0.0
    %v598 = vpop.f32.mrf.mxu0
    %v599 = vadd.f32 0.0, %v598
    %600 = vmatmul.f32.gmra.mxu0 0.0
    %v601 = vpop.f32.mrf.mxu0
    %v602 = vadd.f32 0.0, %v601
    %603 = vdwg.mxu0
    %v604 = vadd.f32 %v529, %v553
    %v605 = vadd.f32 %v530, %v576
    %v606 = vadd.f32 %v532, %v556
    %v607 = vadd.f32 %v533, %v579
    %v608 = vmul.f32 %v604, 0.5
    %v609 = vmul.f32 %v605, 0.5
    %v610 = vmul.f32 %v606, 0.5
    %v611 = vmul.f32 %v607, 0.5
    %v612 = vtanh.pop %v608
    %v613 = vtanh.pop %v609
    %v614 = vtanh.pop %v610
    %v615 = vtanh.pop %v611
    %v616 = vmul.f32 %v612, 0.5
    %v617 = vmul.f32 %v613, 0.5
    %v618 = vmul.f32 %v614, 0.5
    %v619 = vmul.f32 %v615, 0.5
    %v620 = vadd.f32 %v616, 0.5
    %v621 = vadd.f32 %v617, 0.5
    %v622 = vadd.f32 %v618, 0.5
    %v623 = vadd.f32 %v619, 0.5
    %v624 = vadd.f32 %v599, %v528
    %v625 = vadd.f32 %v602, %v528
    %v626 = vmul.f32 %v620, %v624
    %v627 = vmul.f32 %v622, %v625
    %v628 = vadd.f32 %v531, %v626
    %v629 = vadd.f32 %v534, %v627
    %v630 = vtanh.pop %v628
    %v631 = vtanh.pop %v629
    %v632 = vsub.f32 1.0, %v621
    %v633 = vsub.f32 1.0, %v623
    %v634 = vmul.f32 %v632, %v630
    %v635 = vmul.f32 %v633, %v631
    %v636 = vmul.f32 %v621, 0.0
    %v637 = vmul.f32 %v623, 0.0
    %v638 = vadd.f32 %v634, %v636
    %v639 = vadd.f32 %v635, %v637
    %v640 = vld [vmem:[#allocation2 + $0x30] sm:$0xff]
    %v641 = vld [vmem:[#allocation2 + $0x38] sm:$0xff]
    %v642 = vld [vmem:[#allocation2 + $0x40] sm:$0xff]
    %v643 = vld [vmem:[#allocation2 + $0x48] sm:$0xff]
    %v644 = vld [vmem:[#allocation2 + $0x50] sm:$0xff]
    %v645 = vld [vmem:[#allocation2 + $0x58] sm:$0xff]
    %646 = vmatpush.msra.mxu0 %v524
    %647 = vmatpush.msra.mxu0 %v521
    %648 = vmatpush.msra.mxu0 %v518
    %649 = vmatpush.msra.mxu0 %v515
    %650 = vmatpush.msra.mxu0 %v512
    %651 = vmatpush.msra.mxu0 %v509
    %652 = vmatpush.msra.mxu0 %v506
    %653 = vmatpush.msra.mxu0 %v503
    %654 = vmatpush.msra.mxu0 %v500
    %655 = vmatpush.msra.mxu0 %v497
    %656 = vmatpush.msra.mxu0 %v494
    %657 = vmatpush.msra.mxu0 %v491
    %658 = vmatpush.msra.mxu0 %v488
    %659 = vmatpush.msra.mxu0 %v485
    %660 = vmatpush.msra.mxu0 %v482
    %661 = vmatpush.msra.mxu0 %v479
    %662 = vmatmul.f32.gmra.mxu0 %v638
    %v663 = vpop.f32.mrf.mxu0
    %v664 = vadd.f32 0.0, %v663
    %665 = vmatmul.f32.gmra.mxu0 %v639
    %v666 = vpop.f32.mrf.mxu0
    %v667 = vadd.f32 0.0, %v666
    %668 = vdwg.mxu0
    %669 = vmatpush.msra.mxu0 %v525
    %670 = vmatpush.msra.mxu0 %v522
    %671 = vmatpush.msra.mxu0 %v519
    %672 = vmatpush.msra.mxu0 %v516
    %673 = vmatpush.msra.mxu0 %v513
    %674 = vmatpush.msra.mxu0 %v510
    %675 = vmatpush.msra.mxu0 %v507
    %676 = vmatpush.msra.mxu0 %v504
    %677 = vmatpush.msra.mxu0 %v501
    %678 = vmatpush.msra.mxu0 %v498
    %679 = vmatpush.msra.mxu0 %v495
    %680 = vmatpush.msra.mxu0 %v492
    %681 = vmatpush.msra.mxu0 %v489
    %682 = vmatpush.msra.mxu0 %v486
    %683 = vmatpush.msra.mxu0 %v483
    %684 = vmatpush.msra.mxu0 %v480
    %685 = vmatmul.f32.gmra.mxu0 %v638
    %v686 = vpop.f32.mrf.mxu0
    %v687 = vadd.f32 0.0, %v686
    %688 = vmatmul.f32.gmra.mxu0 %v639
    %v689 = vpop.f32.mrf.mxu0
    %v690 = vadd.f32 0.0, %v689
    %691 = vdwg.mxu0
    %692 = vmatpush.msra.mxu0 %v526
    %693 = vmatpush.msra.mxu0 %v523
    %694 = vmatpush.msra.mxu0 %v520
    %695 = vmatpush.msra.mxu0 %v517
    %696 = vmatpush.msra.mxu0 %v514
    %697 = vmatpush.msra.mxu0 %v511
    %698 = vmatpush.msra.mxu0 %v508
    %699 = vmatpush.msra.mxu0 %v505
    %700 = vmatpush.msra.mxu0 %v502
    %701 = vmatpush.msra.mxu0 %v499
    %702 = vmatpush.msra.mxu0 %v496
    %703 = vmatpush.msra.mxu0 %v493
    %704 = vmatpush.msra.mxu0 %v490
    %705 = vmatpush.msra.mxu0 %v487
    %706 = vmatpush.msra.mxu0 %v484
    %707 = vmatpush.msra.mxu0 %v481
    %708 = vmatmul.f32.gmra.mxu0 %v638
    %v709 = vpop.f32.mrf.mxu0
    %v710 = vadd.f32 0.0, %v709
    %711 = vmatmul.f32.gmra.mxu0 %v639
    %v712 = vpop.f32.mrf.mxu0
    %v713 = vadd.f32 0.0, %v712
    %714 = vdwg.mxu0
    %v715 = vadd.f32 %v640, %v664
    %v716 = vadd.f32 %v641, %v687
    %v717 = vadd.f32 %v643, %v667
    %v718 = vadd.f32 %v644, %v690
    %v719 = vmul.f32 %v715, 0.5
    %v720 = vmul.f32 %v716, 0.5
    %v721 = vmul.f32 %v717, 0.5
    %v722 = vmul.f32 %v718, 0.5
    %v723 = vtanh.pop %v719
    %v724 = vtanh.pop %v720
    %v725 = vtanh.pop %v721
    %v726 = vtanh.pop %v722
    %v727 = vmul.f32 %v723, 0.5
    %v728 = vmul.f32 %v724, 0.5
    %v729 = vmul.f32 %v725, 0.5
    %v730 = vmul.f32 %v726, 0.5
    %v731 = vadd.f32 %v727, 0.5
    %v732 = vadd.f32 %v728, 0.5
    %v733 = vadd.f32 %v729, 0.5
    %v734 = vadd.f32 %v730, 0.5
    %v735 = vadd.f32 %v710, %v528
    %v736 = vadd.f32 %v713, %v528
    %v737 = vmul.f32 %v731, %v735
    %v738 = vmul.f32 %v733, %v736
    %v739 = vadd.f32 %v642, %v737
    %v740 = vadd.f32 %v645, %v738
    %v741 = vtanh.pop %v739
    %v742 = vtanh.pop %v740
    %v743 = vsub.f32 1.0, %v732
    %v744 = vsub.f32 1.0, %v734
    %v745 = vmul.f32 %v743, %v741
    %v746 = vmul.f32 %v744, %v742
    %v747 = vmul.f32 %v732, %v638
    %v748 = vmul.f32 %v734, %v639
    %v749 = vadd.f32 %v745, %v747
    %v750 = vadd.f32 %v746, %v748
    %v751 = vld [vmem:[#allocation2 + $0x60] sm:$0xff]
    %v752 = vld [vmem:[#allocation2 + $0x68] sm:$0xff]
    %v753 = vld [vmem:[#allocation2 + $0x70] sm:$0xff]
    %v754 = vld [vmem:[#allocation2 + $0x78] sm:$0xff]
    %v755 = vld [vmem:[#allocation2 + $0x80] sm:$0xff]
    %v756 = vld [vmem:[#allocation2 + $0x88] sm:$0xff]
    %757 = vmatpush.msra.mxu0 %v524
    %758 = vmatpush.msra.mxu0 %v521
    %759 = vmatpush.msra.mxu0 %v518
    %760 = vmatpush.msra.mxu0 %v515
    %761 = vmatpush.msra.mxu0 %v512
    %762 = vmatpush.msra.mxu0 %v509
    %763 = vmatpush.msra.mxu0 %v506
    %764 = vmatpush.msra.mxu0 %v503
    %765 = vmatpush.msra.mxu0 %v500
    %766 = vmatpush.msra.mxu0 %v497
    %767 = vmatpush.msra.mxu0 %v494
    %768 = vmatpush.msra.mxu0 %v491
    %769 = vmatpush.msra.mxu0 %v488
    %770 = vmatpush.msra.mxu0 %v485
    %771 = vmatpush.msra.mxu0 %v482
    %772 = vmatpush.msra.mxu0 %v479
    %773 = vmatmul.f32.gmra.mxu0 %v749
    %v774 = vpop.f32.mrf.mxu0
    %v775 = vadd.f32 0.0, %v774
    %776 = vmatmul.f32.gmra.mxu0 %v750
    %v777 = vpop.f32.mrf.mxu0
    %v778 = vadd.f32 0.0, %v777
    %779 = vdwg.mxu0
    %780 = vmatpush.msra.mxu0 %v525
    %781 = vmatpush.msra.mxu0 %v522
    %782 = vmatpush.msra.mxu0 %v519
    %783 = vmatpush.msra.mxu0 %v516
    %784 = vmatpush.msra.mxu0 %v513
    %785 = vmatpush.msra.mxu0 %v510
    %786 = vmatpush.msra.mxu0 %v507
    %787 = vmatpush.msra.mxu0 %v504
    %788 = vmatpush.msra.mxu0 %v501
    %789 = vmatpush.msra.mxu0 %v498
    %790 = vmatpush.msra.mxu0 %v495
    %791 = vmatpush.msra.mxu0 %v492
    %792 = vmatpush.msra.mxu0 %v489
    %793 = vmatpush.msra.mxu0 %v486
    %794 = vmatpush.msra.mxu0 %v483
    %795 = vmatpush.msra.mxu0 %v480
    %796 = vmatmul.f32.gmra.mxu0 %v749
    %v797 = vpop.f32.mrf.mxu0
    %v798 = vadd.f32 0.0, %v797
    %799 = vmatmul.f32.gmra.mxu0 %v750
    %v800 = vpop.f32.mrf.mxu0
    %v801 = vadd.f32 0.0, %v800
    %802 = vdwg.mxu0
    %803 = vmatpush.msra.mxu0 %v526
    %804 = vmatpush.msra.mxu0 %v523
    %805 = vmatpush.msra.mxu0 %v520
    %806 = vmatpush.msra.mxu0 %v517
    %807 = vmatpush.msra.mxu0 %v514
    %808 = vmatpush.msra.mxu0 %v511
    %809 = vmatpush.msra.mxu0 %v508
    %810 = vmatpush.msra.mxu0 %v505
    %811 = vmatpush.msra.mxu0 %v502
    %812 = vmatpush.msra.mxu0 %v499
    %813 = vmatpush.msra.mxu0 %v496
    %814 = vmatpush.msra.mxu0 %v493
    %815 = vmatpush.msra.mxu0 %v490
    %816 = vmatpush.msra.mxu0 %v487
    %817 = vmatpush.msra.mxu0 %v484
    %818 = vmatpush.msra.mxu0 %v481
    %819 = vmatmul.f32.gmra.mxu0 %v749
    %v820 = vpop.f32.mrf.mxu0
    %v821 = vadd.f32 0.0, %v820
    %822 = vmatmul.f32.gmra.mxu0 %v750
    %v823 = vpop.f32.mrf.mxu0
    %v824 = vadd.f32 0.0, %v823
    %825 = vdwg.mxu0
    %v826 = vadd.f32 %v751, %v775
    %v827 = vadd.f32 %v752, %v798
    %v828 = vadd.f32 %v754, %v778
    %v829 = vadd.f32 %v755, %v801
    %v830 = vmul.f32 %v826, 0.5
    %v831 = vmul.f32 %v827, 0.5
    %v832 = vmul.f32 %v828, 0.5
    %v833 = vmul.f32 %v829, 0.5
    %v834 = vtanh.pop %v830
    %v835 = vtanh.pop %v831
    %v836 = vtanh.pop %v832
    %v837 = vtanh.pop %v833
    %v838 = vmul.f32 %v834, 0.5
    %v839 = vmul.f32 %v835, 0.5
    %v840 = vmul.f32 %v836, 0.5
    %v841 = vmul.f32 %v837, 0.5
    %v842 = vadd.f32 %v838, 0.5
    %v843 = vadd.f32 %v839, 0.5
    %v844 = vadd.f32 %v840, 0.5
    %v845 = vadd.f32 %v841, 0.5
    %v846 = vadd.f32 %v821, %v528
    %v847 = vadd.f32 %v824, %v528
    %v848 = vmul.f32 %v842, %v846
    %v849 = vmul.f32 %v844, %v847
    %v850 = vadd.f32 %v753, %v848
    %v851 = vadd.f32 %v756, %v849
    %v852 = vtanh.pop %v850
    %v853 = vtanh.pop %v851
    %v854 = vsub.f32 1.0, %v843
    %v855 = vsub.f32 1.0, %v845
    %v856 = vmul.f32 %v854, %v852
    %v857 = vmul.f32 %v855, %v853
    %v858 = vmul.f32 %v843, %v749
    %v859 = vmul.f32 %v845, %v750
    %v860 = vadd.f32 %v856, %v858
    %v861 = vadd.f32 %v857, %v859
    %v862 = vld [vmem:[#allocation2 + $0x90] sm:$0xff]
    %v863 = vld [vmem:[#allocation2 + $0x98] sm:$0xff]
    %v864 = vld [vmem:[#allocation2 + $0xa0] sm:$0xff]
    %v865 = vld [vmem:[#allocation2 + $0xa8] sm:$0xff]
    %v866 = vld [vmem:[#allocation2 + $0xb0] sm:$0xff]
    %v867 = vld [vmem:[#allocation2 + $0xb8] sm:$0xff]
    %868 = vmatpush.msra.mxu0 %v524
    %869 = vmatpush.msra.mxu0 %v521
    %870 = vmatpush.msra.mxu0 %v518
    %871 = vmatpush.msra.mxu0 %v515
    %872 = vmatpush.msra.mxu0 %v512
    %873 = vmatpush.msra.mxu0 %v509
    %874 = vmatpush.msra.mxu0 %v506
    %875 = vmatpush.msra.mxu0 %v503
    %876 = vmatpush.msra.mxu0 %v500
    %877 = vmatpush.msra.mxu0 %v497
    %878 = vmatpush.msra.mxu0 %v494
    %879 = vmatpush.msra.mxu0 %v491
    %880 = vmatpush.msra.mxu0 %v488
    %881 = vmatpush.msra.mxu0 %v485
    %882 = vmatpush.msra.mxu0 %v482
    %883 = vmatpush.msra.mxu0 %v479
    %884 = vmatmul.f32.gmra.mxu0 %v860
    %v885 = vpop.f32.mrf.mxu0
    %v886 = vadd.f32 0.0, %v885
    %887 = vmatmul.f32.gmra.mxu0 %v861
    %v888 = vpop.f32.mrf.mxu0
    %v889 = vadd.f32 0.0, %v888
    %890 = vdwg.mxu0
    %891 = vmatpush.msra.mxu0 %v525
    %892 = vmatpush.msra.mxu0 %v522
    %893 = vmatpush.msra.mxu0 %v519
    %894 = vmatpush.msra.mxu0 %v516
    %895 = vmatpush.msra.mxu0 %v513
    %896 = vmatpush.msra.mxu0 %v510
    %897 = vmatpush.msra.mxu0 %v507
    %898 = vmatpush.msra.mxu0 %v504
    %899 = vmatpush.msra.mxu0 %v501
    %900 = vmatpush.msra.mxu0 %v498
    %901 = vmatpush.msra.mxu0 %v495
    %902 = vmatpush.msra.mxu0 %v492
    %903 = vmatpush.msra.mxu0 %v489
    %904 = vmatpush.msra.mxu0 %v486
    %905 = vmatpush.msra.mxu0 %v483
    %906 = vmatpush.msra.mxu0 %v480
    %907 = vmatmul.f32.gmra.mxu0 %v860
    %v908 = vpop.f32.mrf.mxu0
    %v909 = vadd.f32 0.0, %v908
    %910 = vmatmul.f32.gmra.mxu0 %v861
    %v911 = vpop.f32.mrf.mxu0
    %v912 = vadd.f32 0.0, %v911
    %913 = vdwg.mxu0
    %914 = vmatpush.msra.mxu0 %v526
    %915 = vmatpush.msra.mxu0 %v523
    %916 = vmatpush.msra.mxu0 %v520
    %917 = vmatpush.msra.mxu0 %v517
    %918 = vmatpush.msra.mxu0 %v514
    %919 = vmatpush.msra.mxu0 %v511
    %920 = vmatpush.msra.mxu0 %v508
    %921 = vmatpush.msra.mxu0 %v505
    %922 = vmatpush.msra.mxu0 %v502
    %923 = vmatpush.msra.mxu0 %v499
    %924 = vmatpush.msra.mxu0 %v496
    %925 = vmatpush.msra.mxu0 %v493
    %926 = vmatpush.msra.mxu0 %v490
    %927 = vmatpush.msra.mxu0 %v487
    %928 = vmatpush.msra.mxu0 %v484
    %929 = vmatpush.msra.mxu0 %v481
    %930 = vmatmul.f32.gmra.mxu0 %v860
    %v931 = vpop.f32.mrf.mxu0
    %v932 = vadd.f32 0.0, %v931
    %933 = vmatmul.f32.gmra.mxu0 %v861
    %v934 = vpop.f32.mrf.mxu0
    %v935 = vadd.f32 0.0, %v934
    %936 = vdwg.mxu0
    %v937 = vadd.f32 %v862, %v886
    %v938 = vadd.f32 %v863, %v909
    %v939 = vadd.f32 %v865, %v889
    %v940 = vadd.f32 %v866, %v912
    %v941 = vmul.f32 %v937, 0.5
    %v942 = vmul.f32 %v938, 0.5
    %v943 = vmul.f32 %v939, 0.5
    %v944 = vmul.f32 %v940, 0.5
    %v945 = vtanh.pop %v941
    %v946 = vtanh.pop %v942
    %v947 = vtanh.pop %v943
    %v948 = vtanh.pop %v944
    %v949 = vmul.f32 %v945, 0.5
    %v950 = vmul.f32 %v946, 0.5
    %v951 = vmul.f32 %v947, 0.5
    %v952 = vmul.f32 %v948, 0.5
    %v953 = vadd.f32 %v949, 0.5
    %v954 = vadd.f32 %v950, 0.5
    %v955 = vadd.f32 %v951, 0.5
    %v956 = vadd.f32 %v952, 0.5
    %v957 = vadd.f32 %v932, %v528
    %v958 = vadd.f32 %v935, %v528
    %v959 = vmul.f32 %v953, %v957
    %v960 = vmul.f32 %v955, %v958
    %v961 = vadd.f32 %v864, %v959
    %v962 = vadd.f32 %v867, %v960
    %v963 = vtanh.pop %v961
    %v964 = vtanh.pop %v962
    %v965 = vsub.f32 1.0, %v954
    %v966 = vsub.f32 1.0, %v956
    %v967 = vmul.f32 %v965, %v963
    %v968 = vmul.f32 %v966, %v964
    %v969 = vmul.f32 %v954, %v860
    %v970 = vmul.f32 %v956, %v861
    %v971 = vadd.f32 %v967, %v969
    %v972 = vadd.f32 %v968, %v970
    %v973 = vld [vmem:[#allocation2 + $0xc0] sm:$0xff]
    %v974 = vld [vmem:[#allocation2 + $0xc8] sm:$0xff]
    %v975 = vld [vmem:[#allocation2 + $0xd0] sm:$0xff]
    %v976 = vld [vmem:[#allocation2 + $0xd8] sm:$0xff]
    %v977 = vld [vmem:[#allocation2 + $0xe0] sm:$0xff]
    %v978 = vld [vmem:[#allocation2 + $0xe8] sm:$0xff]
    %979 = vmatpush.msra.mxu0 %v524
    %980 = vmatpush.msra.mxu0 %v521
    %981 = vmatpush.msra.mxu0 %v518
    %982 = vmatpush.msra.mxu0 %v515
    %983 = vmatpush.msra.mxu0 %v512
    %984 = vmatpush.msra.mxu0 %v509
    %985 = vmatpush.msra.mxu0 %v506
    %986 = vmatpush.msra.mxu0 %v503
    %987 = vmatpush.msra.mxu0 %v500
    %988 = vmatpush.msra.mxu0 %v497
    %989 = vmatpush.msra.mxu0 %v494
    %990 = vmatpush.msra.mxu0 %v491
    %991 = vmatpush.msra.mxu0 %v488
    %992 = vmatpush.msra.mxu0 %v485
    %993 = vmatpush.msra.mxu0 %v482
    %994 = vmatpush.msra.mxu0 %v479
    %995 = vmatmul.f32.gmra.mxu0 %v971
    %v996 = vpop.f32.mrf.mxu0
    %v997 = vadd.f32 0.0, %v996
    %998 = vmatmul.f32.gmra.mxu0 %v972
    %v999 = vpop.f32.mrf.mxu0
    %v1000 = vadd.f32 0.0, %v999
    %1001 = vdwg.mxu0
    %1002 = vmatpush.msra.mxu0 %v525
    %1003 = vmatpush.msra.mxu0 %v522
    %1004 = vmatpush.msra.mxu0 %v519
    %1005 = vmatpush.msra.mxu0 %v516
    %1006 = vmatpush.msra.mxu0 %v513
    %1007 = vmatpush.msra.mxu0 %v510
    %1008 = vmatpush.msra.mxu0 %v507
    %1009 = vmatpush.msra.mxu0 %v504
    %1010 = vmatpush.msra.mxu0 %v501
    %1011 = vmatpush.msra.mxu0 %v498
    %1012 = vmatpush.msra.mxu0 %v495
    %1013 = vmatpush.msra.mxu0 %v492
    %1014 = vmatpush.msra.mxu0 %v489
    %1015 = vmatpush.msra.mxu0 %v486
    %1016 = vmatpush.msra.mxu0 %v483
    %1017 = vmatpush.msra.mxu0 %v480
    %1018 = vmatmul.f32.gmra.mxu0 %v971
    %v1019 = vpop.f32.mrf.mxu0
    %v1020 = vadd.f32 0.0, %v1019
    %1021 = vmatmul.f32.gmra.mxu0 %v972
    %v1022 = vpop.f32.mrf.mxu0
    %v1023 = vadd.f32 0.0, %v1022
    %1024 = vdwg.mxu0
    %1025 = vmatpush.msra.mxu0 %v526
    %1026 = vmatpush.msra.mxu0 %v523
    %1027 = vmatpush.msra.mxu0 %v520
    %1028 = vmatpush.msra.mxu0 %v517
    %1029 = vmatpush.msra.mxu0 %v514
    %1030 = vmatpush.msra.mxu0 %v511
    %1031 = vmatpush.msra.mxu0 %v508
    %1032 = vmatpush.msra.mxu0 %v505
    %1033 = vmatpush.msra.mxu0 %v502
    %1034 = vmatpush.msra.mxu0 %v499
    %1035 = vmatpush.msra.mxu0 %v496
    %1036 = vmatpush.msra.mxu0 %v493
    %1037 = vmatpush.msra.mxu0 %v490
    %1038 = vmatpush.msra.mxu0 %v487
    %1039 = vmatpush.msra.mxu0 %v484
    %1040 = vmatpush.msra.mxu0 %v481
    %1041 = vmatmul.f32.gmra.mxu0 %v971
    %v1042 = vpop.f32.mrf.mxu0
    %v1043 = vadd.f32 0.0, %v1042
    %1044 = vmatmul.f32.gmra.mxu0 %v972
    %v1045 = vpop.f32.mrf.mxu0
    %v1046 = vadd.f32 0.0, %v1045
    %1047 = vdwg.mxu0
    %v1048 = vadd.f32 %v973, %v997
    %v1049 = vadd.f32 %v974, %v1020
    %v1050 = vadd.f32 %v976, %v1000
    %v1051 = vadd.f32 %v977, %v1023
    %v1052 = vmul.f32 %v1048, 0.5
    %v1053 = vmul.f32 %v1049, 0.5
    %v1054 = vmul.f32 %v1050, 0.5
    %v1055 = vmul.f32 %v1051, 0.5
    %v1056 = vtanh.pop %v1052
    %v1057 = vtanh.pop %v1053
    %v1058 = vtanh.pop %v1054
    %v1059 = vtanh.pop %v1055
    %v1060 = vmul.f32 %v1056, 0.5
    %v1061 = vmul.f32 %v1057, 0.5
    %v1062 = vmul.f32 %v1058, 0.5
    %v1063 = vmul.f32 %v1059, 0.5
    %v1064 = vadd.f32 %v1060, 0.5
    %v1065 = vadd.f32 %v1061, 0.5
    %v1066 = vadd.f32 %v1062, 0.5
    %v1067 = vadd.f32 %v1063, 0.5
    %v1068 = vadd.f32 %v1043, %v528
    %v1069 = vadd.f32 %v1046, %v528
    %v1070 = vmul.f32 %v1064, %v1068
    %v1071 = vmul.f32 %v1066, %v1069
    %v1072 = vadd.f32 %v975, %v1070
    %v1073 = vadd.f32 %v978, %v1071
    %v1074 = vtanh.pop %v1072
    %v1075 = vtanh.pop %v1073
    %v1076 = vsub.f32 1.0, %v1065
    %v1077 = vsub.f32 1.0, %v1067
    %v1078 = vmul.f32 %v1076, %v1074
    %v1079 = vmul.f32 %v1077, %v1075
    %v1080 = vmul.f32 %v1065, %v971
    %v1081 = vmul.f32 %v1067, %v972
    %v1082 = vadd.f32 %v1078, %v1080
    %v1083 = vadd.f32 %v1079, %v1081
    %v1084 = vld [vmem:[#allocation2 + $0xf0] sm:$0xff]
    %v1085 = vld [vmem:[#allocation2 + $0xf8] sm:$0xff]
    %v1086 = vld [vmem:[#allocation2 + $0x100] sm:$0xff]
    %v1087 = vld [vmem:[#allocation2 + $0x108] sm:$0xff]
    %v1088 = vld [vmem:[#allocation2 + $0x110] sm:$0xff]
    %v1089 = vld [vmem:[#allocation2 + $0x118] sm:$0xff]
    %1090 = vmatpush.msra.mxu0 %v524
    %1091 = vmatpush.msra.mxu0 %v521
    %1092 = vmatpush.msra.mxu0 %v518
    %1093 = vmatpush.msra.mxu0 %v515
    %1094 = vmatpush.msra.mxu0 %v512
    %1095 = vmatpush.msra.mxu0 %v509
    %1096 = vmatpush.msra.mxu0 %v506
    %1097 = vmatpush.msra.mxu0 %v503
    %1098 = vmatpush.msra.mxu0 %v500
    %1099 = vmatpush.msra.mxu0 %v497
    %1100 = vmatpush.msra.mxu0 %v494
    %1101 = vmatpush.msra.mxu0 %v491
    %1102 = vmatpush.msra.mxu0 %v488
    %1103 = vmatpush.msra.mxu0 %v485
    %1104 = vmatpush.msra.mxu0 %v482
    %1105 = vmatpush.msra.mxu0 %v479
    %1106 = vmatmul.f32.gmra.mxu0 %v1082
    %v1107 = vpop.f32.mrf.mxu0
    %v1108 = vadd.f32 0.0, %v1107
    %1109 = vmatmul.f32.gmra.mxu0 %v1083
    %v1110 = vpop.f32.mrf.mxu0
    %v1111 = vadd.f32 0.0, %v1110
    %1112 = vdwg.mxu0
    %1113 = vmatpush.msra.mxu0 %v525
    %1114 = vmatpush.msra.mxu0 %v522
    %1115 = vmatpush.msra.mxu0 %v519
    %1116 = vmatpush.msra.mxu0 %v516
    %1117 = vmatpush.msra.mxu0 %v513
    %1118 = vmatpush.msra.mxu0 %v510
    %1119 = vmatpush.msra.mxu0 %v507
    %1120 = vmatpush.msra.mxu0 %v504
    %1121 = vmatpush.msra.mxu0 %v501
    %1122 = vmatpush.msra.mxu0 %v498
    %1123 = vmatpush.msra.mxu0 %v495
    %1124 = vmatpush.msra.mxu0 %v492
    %1125 = vmatpush.msra.mxu0 %v489
    %1126 = vmatpush.msra.mxu0 %v486
    %1127 = vmatpush.msra.mxu0 %v483
    %1128 = vmatpush.msra.mxu0 %v480
    %1129 = vmatmul.f32.gmra.mxu0 %v1082
    %v1130 = vpop.f32.mrf.mxu0
    %v1131 = vadd.f32 0.0, %v1130
    %1132 = vmatmul.f32.gmra.mxu0 %v1083
    %v1133 = vpop.f32.mrf.mxu0
    %v1134 = vadd.f32 0.0, %v1133
    %1135 = vdwg.mxu0
    %1136 = vmatpush.msra.mxu0 %v526
    %1137 = vmatpush.msra.mxu0 %v523
    %1138 = vmatpush.msra.mxu0 %v520
    %1139 = vmatpush.msra.mxu0 %v517
    %1140 = vmatpush.msra.mxu0 %v514
    %1141 = vmatpush.msra.mxu0 %v511
    %1142 = vmatpush.msra.mxu0 %v508
    %1143 = vmatpush.msra.mxu0 %v505
    %1144 = vmatpush.msra.mxu0 %v502
    %1145 = vmatpush.msra.mxu0 %v499
    %1146 = vmatpush.msra.mxu0 %v496
    %1147 = vmatpush.msra.mxu0 %v493
    %1148 = vmatpush.msra.mxu0 %v490
    %1149 = vmatpush.msra.mxu0 %v487
    %1150 = vmatpush.msra.mxu0 %v484
    %1151 = vmatpush.msra.mxu0 %v481
    %1152 = vmatmul.f32.gmra.mxu0 %v1082
    %v1153 = vpop.f32.mrf.mxu0
    %v1154 = vadd.f32 0.0, %v1153
    %1155 = vmatmul.f32.gmra.mxu0 %v1083
    %v1156 = vpop.f32.mrf.mxu0
    %v1157 = vadd.f32 0.0, %v1156
    %1158 = vdwg.mxu0
    %v1159 = vadd.f32 %v1084, %v1108
    %v1160 = vadd.f32 %v1085, %v1131
    %v1161 = vadd.f32 %v1087, %v1111
    %v1162 = vadd.f32 %v1088, %v1134
    %v1163 = vmul.f32 %v1159, 0.5
    %v1164 = vmul.f32 %v1160, 0.5
    %v1165 = vmul.f32 %v1161, 0.5
    %v1166 = vmul.f32 %v1162, 0.5
    %v1167 = vtanh.pop %v1163
    %v1168 = vtanh.pop %v1164
    %v1169 = vtanh.pop %v1165
    %v1170 = vtanh.pop %v1166
    %v1171 = vmul.f32 %v1167, 0.5
    %v1172 = vmul.f32 %v1168, 0.5
    %v1173 = vmul.f32 %v1169, 0.5
    %v1174 = vmul.f32 %v1170, 0.5
    %v1175 = vadd.f32 %v1171, 0.5
    %v1176 = vadd.f32 %v1172, 0.5
    %v1177 = vadd.f32 %v1173, 0.5
    %v1178 = vadd.f32 %v1174, 0.5
    %v1179 = vadd.f32 %v1154, %v528
    %v1180 = vadd.f32 %v1157, %v528
    %v1181 = vmul.f32 %v1175, %v1179
    %v1182 = vmul.f32 %v1177, %v1180
    %v1183 = vadd.f32 %v1086, %v1181
    %v1184 = vadd.f32 %v1089, %v1182
    %v1185 = vtanh.pop %v1183
    %v1186 = vtanh.pop %v1184
    %v1187 = vsub.f32 1.0, %v1176
    %v1188 = vsub.f32 1.0, %v1178
    %v1189 = vmul.f32 %v1187, %v1185
    %v1190 = vmul.f32 %v1188, %v1186
    %v1191 = vmul.f32 %v1176, %v1082
    %v1192 = vmul.f32 %v1178, %v1083
    %v1193 = vadd.f32 %v1189, %v1191
    %v1194 = vadd.f32 %v1190, %v1192
    %v1195 = vld [vmem:[#allocation2 + $0x120] sm:$0xff]
    %v1196 = vld [vmem:[#allocation2 + $0x128] sm:$0xff]
    %v1197 = vld [vmem:[#allocation2 + $0x130] sm:$0xff]
    %v1198 = vld [vmem:[#allocation2 + $0x138] sm:$0xff]
    %v1199 = vld [vmem:[#allocation2 + $0x140] sm:$0xff]
    %v1200 = vld [vmem:[#allocation2 + $0x148] sm:$0xff]
    %1201 = vmatpush.msra.mxu0 %v524
    %1202 = vmatpush.msra.mxu0 %v521
    %1203 = vmatpush.msra.mxu0 %v518
    %1204 = vmatpush.msra.mxu0 %v515
    %1205 = vmatpush.msra.mxu0 %v512
    %1206 = vmatpush.msra.mxu0 %v509
    %1207 = vmatpush.msra.mxu0 %v506
    %1208 = vmatpush.msra.mxu0 %v503
    %1209 = vmatpush.msra.mxu0 %v500
    %1210 = vmatpush.msra.mxu0 %v497
    %1211 = vmatpush.msra.mxu0 %v494
    %1212 = vmatpush.msra.mxu0 %v491
    %1213 = vmatpush.msra.mxu0 %v488
    %1214 = vmatpush.msra.mxu0 %v485
    %1215 = vmatpush.msra.mxu0 %v482
    %1216 = vmatpush.msra.mxu0 %v479
    %1217 = vmatmul.f32.gmra.mxu0 %v1193
    %v1218 = vpop.f32.mrf.mxu0
    %v1219 = vadd.f32 0.0, %v1218
    %1220 = vmatmul.f32.gmra.mxu0 %v1194
    %v1221 = vpop.f32.mrf.mxu0
    %v1222 = vadd.f32 0.0, %v1221
    %1223 = vdwg.mxu0
    %1224 = vmatpush.msra.mxu0 %v525
    %1225 = vmatpush.msra.mxu0 %v522
    %1226 = vmatpush.msra.mxu0 %v519
    %1227 = vmatpush.msra.mxu0 %v516
    %1228 = vmatpush.msra.mxu0 %v513
    %1229 = vmatpush.msra.mxu0 %v510
    %1230 = vmatpush.msra.mxu0 %v507
    %1231 = vmatpush.msra.mxu0 %v504
    %1232 = vmatpush.msra.mxu0 %v501
    %1233 = vmatpush.msra.mxu0 %v498
    %1234 = vmatpush.msra.mxu0 %v495
    %1235 = vmatpush.msra.mxu0 %v492
    %1236 = vmatpush.msra.mxu0 %v489
    %1237 = vmatpush.msra.mxu0 %v486
    %1238 = vmatpush.msra.mxu0 %v483
    %1239 = vmatpush.msra.mxu0 %v480
    %1240 = vmatmul.f32.gmra.mxu0 %v1193
    %v1241 = vpop.f32.mrf.mxu0
    %v1242 = vadd.f32 0.0, %v1241
    %1243 = vmatmul.f32.gmra.mxu0 %v1194
    %v1244 = vpop.f32.mrf.mxu0
    %v1245 = vadd.f32 0.0, %v1244
    %1246 = vdwg.mxu0
    %1247 = vmatpush.msra.mxu0 %v526
    %1248 = vmatpush.msra.mxu0 %v523
    %1249 = vmatpush.msra.mxu0 %v520
    %1250 = vmatpush.msra.mxu0 %v517
    %1251 = vmatpush.msra.mxu0 %v514
    %1252 = vmatpush.msra.mxu0 %v511
    %1253 = vmatpush.msra.mxu0 %v508
    %1254 = vmatpush.msra.mxu0 %v505
    %1255 = vmatpush.msra.mxu0 %v502
    %1256 = vmatpush.msra.mxu0 %v499
    %1257 = vmatpush.msra.mxu0 %v496
    %1258 = vmatpush.msra.mxu0 %v493
    %1259 = vmatpush.msra.mxu0 %v490
    %1260 = vmatpush.msra.mxu0 %v487
    %1261 = vmatpush.msra.mxu0 %v484
    %1262 = vmatpush.msra.mxu0 %v481
    %1263 = vmatmul.f32.gmra.mxu0 %v1193
    %v1264 = vpop.f32.mrf.mxu0
    %v1265 = vadd.f32 0.0, %v1264
    %1266 = vmatmul.f32.gmra.mxu0 %v1194
    %v1267 = vpop.f32.mrf.mxu0
    %v1268 = vadd.f32 0.0, %v1267
    %1269 = vdwg.mxu0
    %v1270 = vadd.f32 %v1195, %v1219
    %v1271 = vadd.f32 %v1196, %v1242
    %v1272 = vadd.f32 %v1198, %v1222
    %v1273 = vadd.f32 %v1199, %v1245
    %v1274 = vmul.f32 %v1270, 0.5
    %v1275 = vmul.f32 %v1271, 0.5
    %v1276 = vmul.f32 %v1272, 0.5
    %v1277 = vmul.f32 %v1273, 0.5
    %v1278 = vtanh.pop %v1274
    %v1279 = vtanh.pop %v1275
    %v1280 = vtanh.pop %v1276
    %v1281 = vtanh.pop %v1277
    %v1282 = vmul.f32 %v1278, 0.5
    %v1283 = vmul.f32 %v1279, 0.5
    %v1284 = vmul.f32 %v1280, 0.5
    %v1285 = vmul.f32 %v1281, 0.5
    %v1286 = vadd.f32 %v1282, 0.5
    %v1287 = vadd.f32 %v1283, 0.5
    %v1288 = vadd.f32 %v1284, 0.5
    %v1289 = vadd.f32 %v1285, 0.5
    %v1290 = vadd.f32 %v1265, %v528
    %v1291 = vadd.f32 %v1268, %v528
    %v1292 = vmul.f32 %v1286, %v1290
    %v1293 = vmul.f32 %v1288, %v1291
    %v1294 = vadd.f32 %v1197, %v1292
    %v1295 = vadd.f32 %v1200, %v1293
    %v1296 = vtanh.pop %v1294
    %v1297 = vtanh.pop %v1295
    %v1298 = vsub.f32 1.0, %v1287
    %v1299 = vsub.f32 1.0, %v1289
    %v1300 = vmul.f32 %v1298, %v1296
    %v1301 = vmul.f32 %v1299, %v1297
    %v1302 = vmul.f32 %v1287, %v1193
    %v1303 = vmul.f32 %v1289, %v1194
    %v1304 = vadd.f32 %v1300, %v1302
    %v1305 = vadd.f32 %v1301, %v1303
    %v1306 = vld [vmem:[#allocation2 + $0x150] sm:$0xff]
    %v1307 = vld [vmem:[#allocation2 + $0x158] sm:$0xff]
    %v1308 = vld [vmem:[#allocation2 + $0x160] sm:$0xff]
    %v1309 = vld [vmem:[#allocation2 + $0x168] sm:$0xff]
    %v1310 = vld [vmem:[#allocation2 + $0x170] sm:$0xff]
    %v1311 = vld [vmem:[#allocation2 + $0x178] sm:$0xff]
    %1312 = vmatpush.msra.mxu0 %v524
    %1313 = vmatpush.msra.mxu0 %v521
    %1314 = vmatpush.msra.mxu0 %v518
    %1315 = vmatpush.msra.mxu0 %v515
    %1316 = vmatpush.msra.mxu0 %v512
    %1317 = vmatpush.msra.mxu0 %v509
    %1318 = vmatpush.msra.mxu0 %v506
    %1319 = vmatpush.msra.mxu0 %v503
    %1320 = vmatpush.msra.mxu0 %v500
    %1321 = vmatpush.msra.mxu0 %v497
    %1322 = vmatpush.msra.mxu0 %v494
    %1323 = vmatpush.msra.mxu0 %v491
    %1324 = vmatpush.msra.mxu0 %v488
    %1325 = vmatpush.msra.mxu0 %v485
    %1326 = vmatpush.msra.mxu0 %v482
    %1327 = vmatpush.msra.mxu0 %v479
    %1328 = vmatmul.f32.gmra.mxu0 %v1304
    %v1329 = vpop.f32.mrf.mxu0
    %v1330 = vadd.f32 0.0, %v1329
    %1331 = vmatmul.f32.gmra.mxu0 %v1305
    %v1332 = vpop.f32.mrf.mxu0
    %v1333 = vadd.f32 0.0, %v1332
    %1334 = vdwg.mxu0
    %1335 = vmatpush.msra.mxu0 %v525
    %1336 = vmatpush.msra.mxu0 %v522
    %1337 = vmatpush.msra.mxu0 %v519
    %1338 = vmatpush.msra.mxu0 %v516
    %1339 = vmatpush.msra.mxu0 %v513
    %1340 = vmatpush.msra.mxu0 %v510
    %1341 = vmatpush.msra.mxu0 %v507
    %1342 = vmatpush.msra.mxu0 %v504
    %1343 = vmatpush.msra.mxu0 %v501
    %1344 = vmatpush.msra.mxu0 %v498
    %1345 = vmatpush.msra.mxu0 %v495
    %1346 = vmatpush.msra.mxu0 %v492
    %1347 = vmatpush.msra.mxu0 %v489
    %1348 = vmatpush.msra.mxu0 %v486
    %1349 = vmatpush.msra.mxu0 %v483
    %1350 = vmatpush.msra.mxu0 %v480
    %1351 = vmatmul.f32.gmra.mxu0 %v1304
    %v1352 = vpop.f32.mrf.mxu0
    %v1353 = vadd.f32 0.0, %v1352
    %1354 = vmatmul.f32.gmra.mxu0 %v1305
    %v1355 = vpop.f32.mrf.mxu0
    %v1356 = vadd.f32 0.0, %v1355
    %1357 = vdwg.mxu0
    %1358 = vmatpush.msra.mxu0 %v526
    %1359 = vmatpush.msra.mxu0 %v523
    %1360 = vmatpush.msra.mxu0 %v520
    %1361 = vmatpush.msra.mxu0 %v517
    %1362 = vmatpush.msra.mxu0 %v514
    %1363 = vmatpush.msra.mxu0 %v511
    %1364 = vmatpush.msra.mxu0 %v508
    %1365 = vmatpush.msra.mxu0 %v505
    %1366 = vmatpush.msra.mxu0 %v502
    %1367 = vmatpush.msra.mxu0 %v499
    %1368 = vmatpush.msra.mxu0 %v496
    %1369 = vmatpush.msra.mxu0 %v493
    %1370 = vmatpush.msra.mxu0 %v490
    %1371 = vmatpush.msra.mxu0 %v487
    %1372 = vmatpush.msra.mxu0 %v484
    %1373 = vmatpush.msra.mxu0 %v481
    %1374 = vmatmul.f32.gmra.mxu0 %v1304
    %v1375 = vpop.f32.mrf.mxu0
    %v1376 = vadd.f32 0.0, %v1375
    %1377 = vmatmul.f32.gmra.mxu0 %v1305
    %v1378 = vpop.f32.mrf.mxu0
    %v1379 = vadd.f32 0.0, %v1378
    %1380 = vdwg.mxu0
    %v1381 = vadd.f32 %v1306, %v1330
    %v1382 = vadd.f32 %v1307, %v1353
    %v1383 = vadd.f32 %v1309, %v1333
    %v1384 = vadd.f32 %v1310, %v1356
    %v1385 = vmul.f32 %v1381, 0.5
    %v1386 = vmul.f32 %v1382, 0.5
    %v1387 = vmul.f32 %v1383, 0.5
    %v1388 = vmul.f32 %v1384, 0.5
    %v1389 = vtanh.pop %v1385
    %v1390 = vtanh.pop %v1386
    %v1391 = vtanh.pop %v1387
    %v1392 = vtanh.pop %v1388
    %v1393 = vmul.f32 %v1389, 0.5
    %v1394 = vmul.f32 %v1390, 0.5
    %v1395 = vmul.f32 %v1391, 0.5
    %v1396 = vmul.f32 %v1392, 0.5
    %v1397 = vadd.f32 %v1393, 0.5
    %v1398 = vadd.f32 %v1394, 0.5
    %v1399 = vadd.f32 %v1395, 0.5
    %v1400 = vadd.f32 %v1396, 0.5
    %v1401 = vadd.f32 %v1376, %v528
    %v1402 = vadd.f32 %v1379, %v528
    %v1403 = vmul.f32 %v1397, %v1401
    %v1404 = vmul.f32 %v1399, %v1402
    %v1405 = vadd.f32 %v1308, %v1403
    %v1406 = vadd.f32 %v1311, %v1404
    %v1407 = vtanh.pop %v1405
    %v1408 = vtanh.pop %v1406
    %v1409 = vsub.f32 1.0, %v1398
    %v1410 = vsub.f32 1.0, %v1400
    %v1411 = vmul.f32 %v1409, %v1407
    %v1412 = vmul.f32 %v1410, %v1408
    %v1413 = vmul.f32 %v1398, %v1304
    %v1414 = vmul.f32 %v1400, %v1305
    %v1415 = vadd.f32 %v1411, %v1413
    %v1416 = vadd.f32 %v1412, %v1414
    %v1417 = vld [vmem:[%s3 + $0x1] sm:$0x1]
    %v1418 = vperm.slane %v1417, 0
    %v1419 = vmul.f32 %v1415, %v1418
    %v1420 = vmul.f32 %v1416, %v1418
    %1421 = vadd.xlane.f32.xlu0 %v1419
    %v1422 = vpop.xlane.xlu0 %1421
    %1423 = vadd.xlane.f32.xlu0 %v1420
    %v1424 = vpop.xlane.xlu0 %1423
    %v1425 = vld [vmem:[%s3 + $0x2] sm:$0x1]
    %v1426 = vperm.slane %v1425, 0
    %v1427 = vadd.f32 %v1422, %v1426
    %v1428 = vadd.f32 %v1424, %v1426
    %vm1429 = vcmask 7168
    %1430 = vst.msk [vmem:[%s4] sm:$0xff] %vm1429, %v1427
    %1431 = vst.msk [vmem:[%s4 + $0x8] sm:$0xff] %vm1429, %v1428
    // Predicated region
    $region26: #{text_classifier_forward.1} parent=1 // pred_check
      _
    $region27: #{text_classifier_forward.1} parent=1 // pred_check_branch
      %1433 = sbr.rel (0) target = $region29
    $region28: #{text_classifier_forward.1} parent=1 // pred_region
      _
    $region29: #{text_classifier_forward.1} parent=1 // pred_fallthru
      _
    // Predicated region
    $region30: #{text_classifier_forward.1} parent=1 // pred_check
      _
    $region31: #{text_classifier_forward.1} parent=1 // pred_check_branch
      %1435 = sbr.rel (0) target = $region33
    $region32: #{text_classifier_forward.1} parent=1 // pred_region
      _
    $region33: #{text_classifier_forward.1} parent=1 // pred_fallthru
      _
    %1436 = vsyncpa [#allocation4], 1
    %1437 = vsyncpa [#allocation6], 1

</llo_original>
